<compile_context>
chip_gen: v7x
topology: tpu7x:2x2x1
jax: 0.10.0
libtpu: 0.0.40
codegen_flags: <defaults>
</compile_context>

<pallas_src>
import jax
import jax.numpy as jnp
from jax.experimental import pallas as pl
from jax.experimental.pallas import tpu as pltpu

EPS = 1e-5          # torch BatchNorm1d default
H1, H2 = 300, 300   # hidden_units


def _elu(x):
    # Forward-only ELU.  exp on the clamped argument avoids any inf in the
    # unselected branch; absolute error vs expm1 is ~1 ulp of 1.0.
    # TODO(synk): switch to jnp.expm1 for better relative accuracy near 0 /
    # grad paths once its Mosaic lowering is guaranteed on all targets.
    return jnp.where(x > 0.0, x, jnp.exp(jnp.minimum(x, 0.0)) - 1.0)


def _bn_normalize(x, inv_b):
    # Training-mode BatchNorm1d normalization (affine folded into next Linear).
    # Single pass over the batch axis: sum and sum of squares.
    s = jnp.sum(x, axis=0, keepdims=True)
    ss = jnp.sum(x * x, axis=0, keepdims=True)
    mean = s * inv_b
    var = ss * inv_b - mean * mean          # biased variance, as torch uses
    return (x - mean) * jax.lax.rsqrt(var + EPS)


def critic_kernel(x_ref, w1_ref, b1_ref, w2_ref, b2_ref, w3_ref, b3_ref, o_ref):
    x = x_ref[...].astype(jnp.float32)
    inv_b = 1.0 / x.shape[0]                # static at trace time

    # bn1 (gamma/beta folded into fc1)
    x = _bn_normalize(x, inv_b)

    # fc1 + ELU — bf16 x bf16 on the MXU, f32 accumulation
    h1 = jnp.dot(x.astype(jnp.bfloat16), w1_ref[...],
                 preferred_element_type=jnp.float32) + b1_ref[...]
    h1 = _elu(h1)

    # bn2 (gamma/beta folded into fc2)
    h1 = _bn_normalize(h1, inv_b)

    # fc2 + ELU
    h2 = jnp.dot(h1.astype(jnp.bfloat16), w2_ref[...],
                 preferred_element_type=jnp.float32) + b2_ref[...]
    h2 = _elu(h2)

    # output head: lane-dense (1, H2) weight row -> VPU multiply + lane reduce
    out = jnp.sum(h2 * w3_ref[...], axis=-1, keepdims=True) + b3_ref[...]
    o_ref[...] = out.astype(o_ref.dtype)


def fold_bn_into_linear(gamma, beta, w, b):
    """(x_hat * gamma + beta) @ w + b == x_hat @ (gamma[:,None] * w) + (beta @ w + b)."""
    gamma = gamma.reshape(-1)
    beta = beta.reshape(1, -1)
    return gamma[:, None] * w, b + beta @ w


def prepare_kernel_params(p):
    """Fold BN affines into the linears, pack the head lane-dense, cast big weights to bf16."""
    w1f, b1f = fold_bn_into_linear(p["bn1_gamma"], p["bn1_beta"], p["w1"], p["b1"])
    w2f, b2f = fold_bn_into_linear(p["bn2_gamma"], p["bn2_beta"], p["w2"], p["b2"])
    return {
        "w1": w1f.astype(jnp.bfloat16),
        "b1": b1f.astype(jnp.float32),
        "w2": w2f.astype(jnp.bfloat16),
        "b2": b2f.astype(jnp.float32),
        "w3_row": p["w3"].reshape(1, -1).astype(jnp.float32),   # (1, H2), lane-dense
        "b3": p["b3"].reshape(1, 1).astype(jnp.float32),
    }


def critic_forward(state, kp):
    B = state.shape[0]
    operands = (state, kp["w1"], kp["b1"], kp["w2"], kp["b2"], kp["w3_row"], kp["b3"])
    vmem = pl.BlockSpec(memory_space=pltpu.MemorySpace.VMEM)
    return pl.pallas_call(
        critic_kernel,
        out_shape=jax.ShapeDtypeStruct((B, 1), jnp.float32),
        in_specs=[vmem] * len(operands),
        out_specs=vmem,
    )(*operands)


def init_params(state_size, key):
    """Deterministic init mirroring the PyTorch module: xavier_uniform_ weights,
    bias filled with 0.01, BatchNorm gamma=1 / beta=0."""
    k1, k2, k3 = jax.random.split(key, 3)

    def xavier(k, fan_in, fan_out):
        bound = jnp.sqrt(6.0 / (fan_in + fan_out))
        return jax.random.uniform(
            k, (fan_in, fan_out), jnp.float32, minval=-bound, maxval=bound
        )

    return {
        "bn1_gamma": jnp.ones((1, state_size), jnp.float32),
        "bn1_beta": jnp.zeros((1, state_size), jnp.float32),
        "w1": xavier(k1, state_size, H1),
        "b1": jnp.full((1, H1), 0.01, jnp.float32),
        "bn2_gamma": jnp.ones((1, H1), jnp.float32),
        "bn2_beta": jnp.zeros((1, H1), jnp.float32),
        "w2": xavier(k2, H1, H2),
        "b2": jnp.full((1, H2), 0.01, jnp.float32),
        "w3": xavier(k3, H2, 1),
        "b3": jnp.full((1, 1), 0.01, jnp.float32),
    }


def critic_ref_folded(state, kp):
    """Plain-JAX mirror of exactly the math the kernel performs (folded BN,
    bf16 weights, bf16 MXU inputs, f32 accumulation)."""
    def bn(x):
        mean = jnp.mean(x, axis=0, keepdims=True)
        var = jnp.mean(x * x, axis=0, keepdims=True) - mean * mean
        return (x - mean) * jax.lax.rsqrt(var + EPS)

    x = bn(state.astype(jnp.float32))
    h1 = _elu(jnp.dot(x.astype(jnp.bfloat16), kp["w1"],
                      preferred_element_type=jnp.float32) + kp["b1"])
    h1 = bn(h1)
    h2 = _elu(jnp.dot(h1.astype(jnp.bfloat16), kp["w2"],
                      preferred_element_type=jnp.float32) + kp["b2"])
    return jnp.sum(h2 * kp["w3_row"], axis=-1, keepdims=True) + kp["b3"]


def critic_ref_f32(state, p):
    """Full-precision reference of the original (unfolded) module math."""
    def bn(x, g, b):
        mean = jnp.mean(x, axis=0, keepdims=True)
        var = jnp.mean((x - mean) ** 2, axis=0, keepdims=True)
        return (x - mean) * jax.lax.rsqrt(var + EPS) * g + b

    def elu(x):
        return jnp.where(x > 0.0, x, jnp.expm1(x))

    x = bn(state, p["bn1_gamma"], p["bn1_beta"])
    x = elu(x @ p["w1"] + p["b1"])
    x = bn(x, p["bn2_gamma"], p["bn2_beta"])
    x = elu(x @ p["w2"] + p["b2"])
    return x @ p["w3"] + p["b3"]


if __name__ == "__main__":
    # B=128 fills the MXU M dimension; everything still tiny (<0.3 MB in VMEM).
    B, STATE_SIZE = 128, 32
    key = jax.random.PRNGKey(0)
    k_state, k_params = jax.random.split(key)

    state = jax.random.normal(k_state, (B, STATE_SIZE), jnp.float32)
    params = init_params(STATE_SIZE, k_params)
    kparams = prepare_kernel_params(params)

    out = jax.block_until_ready(critic_forward(state, kparams))
    assert out.shape == (B, 1)

    # Tight check vs. a plain-JAX mirror of the kernel's exact math.
    ref_mirror = critic_ref_folded(state, kparams)
    err_mirror = float(jnp.max(jnp.abs(out - ref_mirror)))
    assert jnp.allclose(out, ref_mirror, atol=5e-4, rtol=5e-4), err_mirror

    # Loose check vs. the original full-f32 module math (bf16 weight storage
    # introduces only ~0.2% relative perturbation).
    ref_full = critic_ref_f32(state, params)
    err_full = float(jnp.max(jnp.abs(out - ref_full)))
    assert jnp.allclose(out, ref_full, atol=1e-1, rtol=1e-1), err_full

    print("KERNEL_OK")
</pallas_src>

<mosaic_0001>
module attributes {stable_mosaic.version = 11 : i64} {
  func.func @critic_kernel(%arg0: memref<128x32xf32, #tpu.memory_space<vmem>>, %arg1: memref<32x300xbf16, #tpu.memory_space<vmem>>, %arg2: memref<1x300xf32, #tpu.memory_space<vmem>>, %arg3: memref<300x300xbf16, #tpu.memory_space<vmem>>, %arg4: memref<1x300xf32, #tpu.memory_space<vmem>>, %arg5: memref<1x300xf32, #tpu.memory_space<vmem>>, %arg6: memref<1x1xf32, #tpu.memory_space<vmem>>, %arg7: memref<128x1xf32, #tpu.memory_space<vmem>>) attributes {dimension_semantics = [], scalar_prefetch = 0 : i64, scratch_operands = 0 : i64, tpu.core_type = #tpu.core_type<tc>} {
    %c0 = arith.constant 0 : index
    %c0_0 = arith.constant 0 : index
    %0 = vector.load %arg0[%c0, %c0_0] : memref<128x32xf32, #tpu.memory_space<vmem>>, vector<128x32xf32>
    %cst = arith.constant dense<0.000000e+00> : vector<32xf32>
    %1 = vector.multi_reduction <add>, %0, %cst [0] : vector<128x32xf32> to vector<32xf32>
    %2 = vector.shape_cast %1 : vector<32xf32> to vector<1x32xf32>
    %3 = arith.mulf %0, %0 : vector<128x32xf32>
    %cst_1 = arith.constant dense<0.000000e+00> : vector<32xf32>
    %4 = vector.multi_reduction <add>, %3, %cst_1 [0] : vector<128x32xf32> to vector<32xf32>
    %5 = vector.shape_cast %4 : vector<32xf32> to vector<1x32xf32>
    %cst_2 = arith.constant 7.812500e-03 : f32
    %6 = vector.broadcast %cst_2 : f32 to vector<1x32xf32>
    %7 = arith.mulf %2, %6 : vector<1x32xf32>
    %cst_3 = arith.constant 7.812500e-03 : f32
    %8 = vector.broadcast %cst_3 : f32 to vector<1x32xf32>
    %9 = arith.mulf %5, %8 : vector<1x32xf32>
    %10 = arith.mulf %7, %7 : vector<1x32xf32>
    %11 = arith.subf %9, %10 : vector<1x32xf32>
    %12 = vector.broadcast %7 : vector<1x32xf32> to vector<128x32xf32>
    %13 = arith.subf %0, %12 : vector<128x32xf32>
    %cst_4 = arith.constant 9.99999974E-6 : f32
    %14 = vector.broadcast %cst_4 : f32 to vector<1x32xf32>
    %15 = arith.addf %11, %14 : vector<1x32xf32>
    %16 = math.rsqrt %15 : vector<1x32xf32>
    %17 = vector.broadcast %16 : vector<1x32xf32> to vector<128x32xf32>
    %18 = arith.mulf %13, %17 : vector<128x32xf32>
    %19 = arith.truncf %18 : vector<128x32xf32> to vector<128x32xbf16>
    %c0_5 = arith.constant 0 : index
    %c0_6 = arith.constant 0 : index
    %20 = vector.load %arg1[%c0_5, %c0_6] : memref<32x300xbf16, #tpu.memory_space<vmem>>, vector<32x300xbf16>
    %cst_7 = arith.constant dense<0.000000e+00> : vector<128x300xf32>
    %21 = tpu.matmul %19, %20, %cst_7 {dimension_numbers = #tpu.dot_dimension_numbers<[1], [0], [0], [1], [0, 0, 1, 1], [], []>} : vector<128x32xbf16>, vector<32x300xbf16>, vector<128x300xf32> -> vector<128x300xf32>
    %c0_8 = arith.constant 0 : index
    %c0_9 = arith.constant 0 : index
    %22 = vector.load %arg2[%c0_8, %c0_9] : memref<1x300xf32, #tpu.memory_space<vmem>>, vector<1x300xf32>
    %23 = vector.broadcast %22 : vector<1x300xf32> to vector<128x300xf32>
    %24 = arith.addf %21, %23 : vector<128x300xf32>
    %cst_10 = arith.constant 0.000000e+00 : f32
    %25 = vector.broadcast %cst_10 : f32 to vector<128x300xf32>
    %26 = arith.cmpf ogt, %24, %25 : vector<128x300xf32>
    %cst_11 = arith.constant 0.000000e+00 : f32
    %27 = vector.broadcast %cst_11 : f32 to vector<128x300xf32>
    %28 = arith.minimumf %24, %27 : vector<128x300xf32>
    %29 = math.exp %28 : vector<128x300xf32>
    %cst_12 = arith.constant 1.000000e+00 : f32
    %30 = vector.broadcast %cst_12 : f32 to vector<128x300xf32>
    %31 = arith.subf %29, %30 : vector<128x300xf32>
    %32 = arith.select %26, %24, %31 : vector<128x300xi1>, vector<128x300xf32>
    %cst_13 = arith.constant dense<0.000000e+00> : vector<300xf32>
    %33 = vector.multi_reduction <add>, %32, %cst_13 [0] : vector<128x300xf32> to vector<300xf32>
    %34 = vector.shape_cast %33 : vector<300xf32> to vector<1x300xf32>
    %35 = arith.mulf %32, %32 : vector<128x300xf32>
    %cst_14 = arith.constant dense<0.000000e+00> : vector<300xf32>
    %36 = vector.multi_reduction <add>, %35, %cst_14 [0] : vector<128x300xf32> to vector<300xf32>
    %37 = vector.shape_cast %36 : vector<300xf32> to vector<1x300xf32>
    %cst_15 = arith.constant 7.812500e-03 : f32
    %38 = vector.broadcast %cst_15 : f32 to vector<1x300xf32>
    %39 = arith.mulf %34, %38 : vector<1x300xf32>
    %cst_16 = arith.constant 7.812500e-03 : f32
    %40 = vector.broadcast %cst_16 : f32 to vector<1x300xf32>
    %41 = arith.mulf %37, %40 : vector<1x300xf32>
    %42 = arith.mulf %39, %39 : vector<1x300xf32>
    %43 = arith.subf %41, %42 : vector<1x300xf32>
    %44 = vector.broadcast %39 : vector<1x300xf32> to vector<128x300xf32>
    %45 = arith.subf %32, %44 : vector<128x300xf32>
    %cst_17 = arith.constant 9.99999974E-6 : f32
    %46 = vector.broadcast %cst_17 : f32 to vector<1x300xf32>
    %47 = arith.addf %43, %46 : vector<1x300xf32>
    %48 = math.rsqrt %47 : vector<1x300xf32>
    %49 = vector.broadcast %48 : vector<1x300xf32> to vector<128x300xf32>
    %50 = arith.mulf %45, %49 : vector<128x300xf32>
    %51 = arith.truncf %50 : vector<128x300xf32> to vector<128x300xbf16>
    %c0_18 = arith.constant 0 : index
    %c0_19 = arith.constant 0 : index
    %52 = vector.load %arg3[%c0_18, %c0_19] : memref<300x300xbf16, #tpu.memory_space<vmem>>, vector<300x300xbf16>
    %cst_20 = arith.constant dense<0.000000e+00> : vector<128x300xf32>
    %53 = tpu.matmul %51, %52, %cst_20 {dimension_numbers = #tpu.dot_dimension_numbers<[1], [0], [0], [1], [0, 0, 1, 1], [], []>} : vector<128x300xbf16>, vector<300x300xbf16>, vector<128x300xf32> -> vector<128x300xf32>
    %c0_21 = arith.constant 0 : index
    %c0_22 = arith.constant 0 : index
    %54 = vector.load %arg4[%c0_21, %c0_22] : memref<1x300xf32, #tpu.memory_space<vmem>>, vector<1x300xf32>
    %55 = vector.broadcast %54 : vector<1x300xf32> to vector<128x300xf32>
    %56 = arith.addf %53, %55 : vector<128x300xf32>
    %cst_23 = arith.constant 0.000000e+00 : f32
    %57 = vector.broadcast %cst_23 : f32 to vector<128x300xf32>
    %58 = arith.cmpf ogt, %56, %57 : vector<128x300xf32>
    %cst_24 = arith.constant 0.000000e+00 : f32
    %59 = vector.broadcast %cst_24 : f32 to vector<128x300xf32>
    %60 = arith.minimumf %56, %59 : vector<128x300xf32>
    %61 = math.exp %60 : vector<128x300xf32>
    %cst_25 = arith.constant 1.000000e+00 : f32
    %62 = vector.broadcast %cst_25 : f32 to vector<128x300xf32>
    %63 = arith.subf %61, %62 : vector<128x300xf32>
    %64 = arith.select %58, %56, %63 : vector<128x300xi1>, vector<128x300xf32>
    %c0_26 = arith.constant 0 : index
    %c0_27 = arith.constant 0 : index
    %65 = vector.load %arg5[%c0_26, %c0_27] : memref<1x300xf32, #tpu.memory_space<vmem>>, vector<1x300xf32>
    %66 = vector.broadcast %65 : vector<1x300xf32> to vector<128x300xf32>
    %67 = arith.mulf %64, %66 : vector<128x300xf32>
    %cst_28 = arith.constant dense<0.000000e+00> : vector<128xf32>
    %68 = vector.multi_reduction <add>, %67, %cst_28 [1] : vector<128x300xf32> to vector<128xf32>
    %69 = vector.shape_cast %68 : vector<128xf32> to vector<128x1xf32>
    %c0_29 = arith.constant 0 : index
    %c0_30 = arith.constant 0 : index
    %70 = vector.load %arg6[%c0_29, %c0_30] : memref<1x1xf32, #tpu.memory_space<vmem>>, vector<1x1xf32>
    %71 = vector.broadcast %70 : vector<1x1xf32> to vector<128x1xf32>
    %72 = arith.addf %69, %71 : vector<128x1xf32>
    %c0_31 = arith.constant 0 : index
    %c0_32 = arith.constant 0 : index
    %73 = vector.load %arg7[%c0_31, %c0_32] : memref<128x1xf32, #tpu.memory_space<vmem>>, vector<128x1xf32>
    tpu.vector_store %arg7[%c0_31, %c0_32], %72 {strides = array<i32>} : memref<128x1xf32, #tpu.memory_space<vmem>>, vector<128x1xf32>,
    return
  }
}

</mosaic_0001>

<llo_original>
// kernel: tpu_custom_call.1
$region0: #{tpu_custom_call.1}
  #allocation0 [shape = 'u32[]', space=smem, size = 0x4, offset = 0x4, fixed_abs, tag = 'smem constant byte address 0x4 - core index']
  #allocation1 [shape = 'u32[144,128]{1,0:T(1,128)}', space=vmem, size = 0x12000, scoped, tag = 'internal scratch']
  #allocation2 [shape = 'f32[1,1]{1,0:T(1,128)S(1)}', space=vmem, size = 0x200, scoped, tag = 'scoped memory for tpu_custom_call.1']
  %s0 = inlined_call_operand.vmem [shape: f32[128,32], index: 0, kind: input, shape index: {}]
  %s1 = inlined_call_operand.vmem [shape: bf16[32,300], index: 1, kind: input, shape index: {}]
  %s2 = inlined_call_operand.vmem [shape: f32[1,300], index: 2, kind: input, shape index: {}]
  %s3 = inlined_call_operand.hbm [shape: bf16[300,300], index: 3, kind: input, shape index: {}]
  %s4 = inlined_call_operand.vmem [shape: f32[1,300], index: 4, kind: input, shape index: {}]
  %s5 = inlined_call_operand.vmem [shape: f32[1,300], index: 5, kind: input, shape index: {}]
  %s6 = inlined_call_operand.<no memory space> [shape: f32[1,1], index: 6, kind: input, shape index: {}]
  %s7 = inlined_call_operand.vmem [shape: f32[128,1], index: 7, kind: output, shape index: {}]
  %s8 = sld [smem:[#allocation0]]
  $region42: #{tpu_custom_call.1} parent=0
    _
  %s10 = ssub.s32 1, %s8
  %s11 = scalar_select 0, %s10, %s8
  %v12 = vstv %s6
  %13 = vst [vmem:[#allocation2] sm:$0x1] %v12
  $region1: #{tpu_custom_call.1} parent=0
    #allocation3 [shape = 'u8[233472]{0}', space=vmem, size = 0x39000, scoped, tag = 'input window, operand 3, single buffered']
    #allocation4 [shape = 's32[1]{0}', space=sflag, size = 0x4, scoped, tag = 'scoped memory for tpu_custom_call.1']
    %14 = vsyncpa [#allocation4], 0
    // Predicated region
    $region2: #{tpu_custom_call.1} parent=1 // pred_check
      _
    $region3: #{tpu_custom_call.1} parent=1 // pred_check_branch
      %16 = sbr.rel (0) target = $region5
    $region4: #{tpu_custom_call.1} parent=1 // pred_region
      _
    $region5: #{tpu_custom_call.1} parent=1 // pred_fallthru
      _
    // Predicated region
    $region6: #{tpu_custom_call.1} parent=1 // pred_check
      _
    $region7: #{tpu_custom_call.1} parent=1 // pred_check_branch
      %18 = sbr.rel (0) target = $region9
    $region8: #{tpu_custom_call.1} parent=1 // pred_region
      _
    $region9: #{tpu_custom_call.1} parent=1 // pred_fallthru
      _
    // Predicated region
    $region10: #{tpu_custom_call.1} parent=1 // pred_check
      _
    $region11: #{tpu_custom_call.1} parent=1 // pred_check_branch
      %20 = sbr.rel (0) target = $region13
    $region12: #{tpu_custom_call.1} parent=1 // pred_region
      _
    $region13: #{tpu_custom_call.1} parent=1 // pred_fallthru
      _
    // Predicated region
    $region14: #{tpu_custom_call.1} parent=1 // pred_check
      _
    $region15: #{tpu_custom_call.1} parent=1 // pred_check_branch
      %22 = sbr.rel (0) target = $region17
    $region16: #{tpu_custom_call.1} parent=1 // pred_region
      %s24 = ssub.s32 7296, 7296
      %25 = vsyncadd [#allocation4], %s24
      %s26 = sshll.u32 [#allocation3], 4
      %s27 = int_to_ptr.vmem [resolvable:$true] %s26
      %32 = dma.hbm_to_vmem [thread:$0]  %s3, 7296, %s27, [#allocation4], 192, 192, 12
    $region17: #{tpu_custom_call.1} parent=1 // pred_fallthru
      _
    // Predicated region
    $region18: #{tpu_custom_call.1} parent=1 // pred_check
      _
    $region19: #{tpu_custom_call.1} parent=1 // pred_check_branch
      %34 = sbr.rel (0) target = $region21
    $region20: #{tpu_custom_call.1} parent=1 // pred_region
      _
    $region21: #{tpu_custom_call.1} parent=1 // pred_fallthru
      _
    // Predicated region
    $region22: #{tpu_custom_call.1} parent=1 // pred_check
      _
    $region23: #{tpu_custom_call.1} parent=1 // pred_check_branch
      %36 = sbr.rel (0) target = $region25
    $region24: #{tpu_custom_call.1} parent=1 // pred_region
      _
    $region25: #{tpu_custom_call.1} parent=1 // pred_fallthru
      _
    // Predicated region
    $region26: #{tpu_custom_call.1} parent=1 // pred_check
      _
    $region27: #{tpu_custom_call.1} parent=1 // pred_check_branch
      %38 = sbr.rel (0) target = $region29
    $region28: #{tpu_custom_call.1} parent=1 // pred_region
      _
    $region29: #{tpu_custom_call.1} parent=1 // pred_fallthru
      _
    // Predicated region
    $region30: #{tpu_custom_call.1} parent=1 // pred_check
      _
    $region31: #{tpu_custom_call.1} parent=1 // pred_check_branch
      %40 = sbr.rel (0) target = $region33
    $region32: #{tpu_custom_call.1} parent=1 // pred_region
      %41 = dma.done [#allocation4], 7296
    $region33: #{tpu_custom_call.1} parent=1 // pred_fallthru
      _
    %v43 = vld [vmem:[%s0] sm:$0xff]
    %v44 = vld [vmem:[%s0 + $0x8] sm:$0xff]
    %v45 = vld [vmem:[%s0 + $0x10] sm:$0xff]
    %v46 = vld [vmem:[%s0 + $0x18] sm:$0xff]
    %v47 = vld [vmem:[%s0 + $0x20] sm:$0xff]
    %v48 = vld [vmem:[%s0 + $0x28] sm:$0xff]
    %v49 = vld [vmem:[%s0 + $0x30] sm:$0xff]
    %v50 = vld [vmem:[%s0 + $0x38] sm:$0xff]
    %v51 = vld [vmem:[%s0 + $0x40] sm:$0xff]
    %v52 = vld [vmem:[%s0 + $0x48] sm:$0xff]
    %v53 = vld [vmem:[%s0 + $0x50] sm:$0xff]
    %v54 = vld [vmem:[%s0 + $0x58] sm:$0xff]
    %v55 = vld [vmem:[%s0 + $0x60] sm:$0xff]
    %v56 = vld [vmem:[%s0 + $0x68] sm:$0xff]
    %v57 = vld [vmem:[%s0 + $0x70] sm:$0xff]
    %v58 = vld [vmem:[%s0 + $0x78] sm:$0xff]
    %vm59 = vcmask 261120
    %v60 = vsel %vm59, %v43, 0.0
    %v61 = vsel %vm59, %v44, 0.0
    %v62 = vadd.f32 %v60, %v61
    %v63 = vsel %vm59, %v45, 0.0
    %v64 = vadd.f32 %v62, %v63
    %v65 = vsel %vm59, %v46, 0.0
    %v66 = vadd.f32 %v64, %v65
    %v67 = vsel %vm59, %v47, 0.0
    %v68 = vadd.f32 %v66, %v67
    %v69 = vsel %vm59, %v48, 0.0
    %v70 = vadd.f32 %v68, %v69
    %v71 = vsel %vm59, %v49, 0.0
    %v72 = vadd.f32 %v70, %v71
    %v73 = vsel %vm59, %v50, 0.0
    %v74 = vadd.f32 %v72, %v73
    %v75 = vsel %vm59, %v51, 0.0
    %v76 = vadd.f32 %v74, %v75
    %v77 = vsel %vm59, %v52, 0.0
    %v78 = vadd.f32 %v76, %v77
    %v79 = vsel %vm59, %v53, 0.0
    %v80 = vadd.f32 %v78, %v79
    %v81 = vsel %vm59, %v54, 0.0
    %v82 = vadd.f32 %v80, %v81
    %v83 = vsel %vm59, %v55, 0.0
    %v84 = vadd.f32 %v82, %v83
    %v85 = vsel %vm59, %v56, 0.0
    %v86 = vadd.f32 %v84, %v85
    %v87 = vsel %vm59, %v57, 0.0
    %v88 = vadd.f32 %v86, %v87
    %v89 = vsel %vm59, %v58, 0.0
    %v90 = vadd.f32 %v88, %v89
    %v91 = vrot.slane %v90, 4
    %v92 = vadd.f32 %v90, %v91
    %v93 = vrot.slane %v92, 2
    %v94 = vadd.f32 %v92, %v93
    %v95 = vrot.slane %v94, 1
    %v96 = vadd.f32 %v94, %v95
    %v97 = vmul.f32 %v43, %v43
    %v98 = vmul.f32 %v44, %v44
    %v99 = vmul.f32 %v45, %v45
    %v100 = vmul.f32 %v46, %v46
    %v101 = vmul.f32 %v47, %v47
    %v102 = vmul.f32 %v48, %v48
    %v103 = vmul.f32 %v49, %v49
    %v104 = vmul.f32 %v50, %v50
    %v105 = vmul.f32 %v51, %v51
    %v106 = vmul.f32 %v52, %v52
    %v107 = vmul.f32 %v53, %v53
    %v108 = vmul.f32 %v54, %v54
    %v109 = vmul.f32 %v55, %v55
    %v110 = vmul.f32 %v56, %v56
    %v111 = vmul.f32 %v57, %v57
    %v112 = vmul.f32 %v58, %v58
    %v113 = vsel %vm59, %v97, 0.0
    %v114 = vsel %vm59, %v98, 0.0
    %v115 = vadd.f32 %v113, %v114
    %v116 = vsel %vm59, %v99, 0.0
    %v117 = vadd.f32 %v115, %v116
    %v118 = vsel %vm59, %v100, 0.0
    %v119 = vadd.f32 %v117, %v118
    %v120 = vsel %vm59, %v101, 0.0
    %v121 = vadd.f32 %v119, %v120
    %v122 = vsel %vm59, %v102, 0.0
    %v123 = vadd.f32 %v121, %v122
    %v124 = vsel %vm59, %v103, 0.0
    %v125 = vadd.f32 %v123, %v124
    %v126 = vsel %vm59, %v104, 0.0
    %v127 = vadd.f32 %v125, %v126
    %v128 = vsel %vm59, %v105, 0.0
    %v129 = vadd.f32 %v127, %v128
    %v130 = vsel %vm59, %v106, 0.0
    %v131 = vadd.f32 %v129, %v130
    %v132 = vsel %vm59, %v107, 0.0
    %v133 = vadd.f32 %v131, %v132
    %v134 = vsel %vm59, %v108, 0.0
    %v135 = vadd.f32 %v133, %v134
    %v136 = vsel %vm59, %v109, 0.0
    %v137 = vadd.f32 %v135, %v136
    %v138 = vsel %vm59, %v110, 0.0
    %v139 = vadd.f32 %v137, %v138
    %v140 = vsel %vm59, %v111, 0.0
    %v141 = vadd.f32 %v139, %v140
    %v142 = vsel %vm59, %v112, 0.0
    %v143 = vadd.f32 %v141, %v142
    %v144 = vrot.slane %v143, 4
    %v145 = vadd.f32 %v143, %v144
    %v146 = vrot.slane %v145, 2
    %v147 = vadd.f32 %v145, %v146
    %v148 = vrot.slane %v147, 1
    %v149 = vadd.f32 %v147, %v148
    %v150 = vmul.f32 %v96, 0.0078125
    %v151 = vmul.f32 %v149, 0.0078125
    %v152 = vmul.f32 %v150, %v150
    %v153 = vsub.f32 %v151, %v152
    %v154 = vsub.f32 %v43, %v150
    %v155 = vsub.f32 %v44, %v150
    %v156 = vsub.f32 %v45, %v150
    %v157 = vsub.f32 %v46, %v150
    %v158 = vsub.f32 %v47, %v150
    %v159 = vsub.f32 %v48, %v150
    %v160 = vsub.f32 %v49, %v150
    %v161 = vsub.f32 %v50, %v150
    %v162 = vsub.f32 %v51, %v150
    %v163 = vsub.f32 %v52, %v150
    %v164 = vsub.f32 %v53, %v150
    %v165 = vsub.f32 %v54, %v150
    %v166 = vsub.f32 %v55, %v150
    %v167 = vsub.f32 %v56, %v150
    %v168 = vsub.f32 %v57, %v150
    %v169 = vsub.f32 %v58, %v150
    %v170 = vadd.f32 %v153, 1e-05
    %v171 = vrsqrt.pop %v170
    %v172 = vmul.f32 %v154, %v171
    %v173 = vmul.f32 %v155, %v171
    %v174 = vmul.f32 %v156, %v171
    %v175 = vmul.f32 %v157, %v171
    %v176 = vmul.f32 %v158, %v171
    %v177 = vmul.f32 %v159, %v171
    %v178 = vmul.f32 %v160, %v171
    %v179 = vmul.f32 %v161, %v171
    %v180 = vmul.f32 %v162, %v171
    %v181 = vmul.f32 %v163, %v171
    %v182 = vmul.f32 %v164, %v171
    %v183 = vmul.f32 %v165, %v171
    %v184 = vmul.f32 %v166, %v171
    %v185 = vmul.f32 %v167, %v171
    %v186 = vmul.f32 %v168, %v171
    %v187 = vmul.f32 %v169, %v171
    %v188 = vpack.c.bf16 %v173, %v172
    %v189 = vpack.c.bf16 %v175, %v174
    %v190 = vpack.c.bf16 %v177, %v176
    %v191 = vpack.c.bf16 %v179, %v178
    %v192 = vpack.c.bf16 %v181, %v180
    %v193 = vpack.c.bf16 %v183, %v182
    %v194 = vpack.c.bf16 %v185, %v184
    %v195 = vpack.c.bf16 %v187, %v186
    %v196 = vld [vmem:[%s1] sm:$0xff]
    %v197 = vld [vmem:[%s1 + $0x8] sm:$0xf]
    %v198 = vld [vmem:[%s1 + $0xc] sm:$0xff]
    %v199 = vld [vmem:[%s1 + $0x14] sm:$0xf]
    %v200 = vld [vmem:[%s1 + $0x18] sm:$0xff]
    %v201 = vld [vmem:[%s1 + $0x20] sm:$0xf]
    %v202 = vld [vmem:[%s1 + $0x24] sm:$0xff]
    %v203 = vld [vmem:[%s1 + $0x2c] sm:$0xf]
    %v204 = vld [vmem:[%s2] sm:$0x7]
    %v206 = vlaneseq
    %v207 = vshrl.u32 %v206, 7
    %v208 = vsub.s32 0, %v207
    %v209 = vrot.slane %v204, %v208
    %v210 = vlaneseq
    %v211 = vshrl.u32 %v210, 7
    %v212 = vsub.s32 1, %v211
    %v213 = vrot.slane %v204, %v212
    %v214 = vlaneseq
    %v215 = vshrl.u32 %v214, 7
    %v216 = vsub.s32 2, %v215
    %v217 = vrot.slane %v204, %v216
    %v229 = vunpack.c.l.b16 %v196
    %v230 = vunpack.c.h.b16 %v196
    %v231 = vunpack.c.l.b16 %v197
    %v232 = vunpack.c.l.b16 %v198
    %v233 = vunpack.c.h.b16 %v198
    %v234 = vunpack.c.l.b16 %v199
    %v235 = vunpack.c.l.b16 %v200
    %v236 = vunpack.c.h.b16 %v200
    %v237 = vunpack.c.l.b16 %v201
    %v238 = vunpack.c.l.b16 %v202
    %v239 = vunpack.c.h.b16 %v202
    %v240 = vunpack.c.l.b16 %v203
    %v241 = vpack.c.b16 %v232, %v229
    %v242 = vpack.c.b16 %v233, %v230
    %v243 = vpack.c.b16 %v234, %v231
    %v244 = vpack.c.b16 %v238, %v235
    %v245 = vpack.c.b16 %v239, %v236
    %v246 = vpack.c.b16 %v240, %v237
    %v254 = vsel %vm59, %v188, 0
    %v257 = vsel %vm59, %v189, 0
    %v260 = vsel %vm59, %v190, 0
    %v263 = vsel %vm59, %v191, 0
    %v266 = vsel %vm59, %v192, 0
    %v269 = vsel %vm59, %v193, 0
    %v272 = vsel %vm59, %v194, 0
    %v275 = vsel %vm59, %v195, 0
    %277 = vmatprep.subr.bf16.mxu0 %v242
    %278 = vmatpush1.bf16.msra.mxu0 %v241
    %279 = vmatprep.subr.bf16.mxu0 %v245
    %280 = vmatpush1.bf16.msra.mxu0 %v244
    %281 = vmatprep.subr.bf16.mxu0 0
    %282 = vmatpush1.bf16.msra.mxu0 0
    %283 = vmatprep.subr.bf16.mxu0 0
    %284 = vmatpush1.bf16.msra.mxu0 0
    %285 = vmatprep.subr.bf16.mxu0 0
    %286 = vmatpush1.bf16.msra.mxu0 0
    %287 = vmatprep.subr.bf16.mxu0 0
    %288 = vmatpush1.bf16.msra.mxu0 0
    %289 = vmatprep.subr.bf16.mxu0 0
    %290 = vmatpush1.bf16.msra.mxu0 0
    %291 = vmatprep.subr.bf16.mxu0 0
    %292 = vmatpush1.bf16.msra.mxu0 0
    %293 = vmatprep.subr.bf16.mxu0 0
    %294 = vmatpush1.bf16.msra.mxu0 0
    %295 = vmatprep.subr.bf16.mxu0 0
    %296 = vmatpush1.bf16.msra.mxu0 0
    %297 = vmatprep.subr.bf16.mxu0 0
    %298 = vmatpush1.bf16.msra.mxu0 0
    %299 = vmatprep.subr.bf16.mxu0 0
    %300 = vmatpush1.bf16.msra.mxu0 0
    %301 = vmatprep.subr.bf16.mxu0 0
    %302 = vmatpush1.bf16.msra.mxu0 0
    %303 = vmatprep.subr.bf16.mxu0 0
    %304 = vmatpush1.bf16.msra.mxu0 0
    %305 = vmatprep.subr.bf16.mxu0 0
    %306 = vmatpush1.bf16.msra.mxu0 0
    %307 = vmatprep.subr.bf16.mxu0 0
    %308 = vmatpush1.bf16.msra.mxu0 0
    %309 = vmatprep.mubr.bf16.mxu0 0
    %310 = vmatmul.mubr.bf16.gmra.mrb[0].mxu0 %v254
    %v311 = vpop.f32.mrb[0].mxu0
    %v312 = vadd.f32 %v209, %v311
    %v313 = vpop.f32.mrb[0].mxu0
    %v314 = vadd.f32 %v213, %v313
    %v315 = vpop.f32.mrb[0].mxu0
    %v316 = vadd.f32 %v209, %v315
    %v317 = vpop.f32.mrb[0].mxu0
    %v318 = vadd.f32 %v213, %v317
    %319 = vmatprep.mubr.bf16.mxu0 0
    %320 = vmatmul.mubr.bf16.gmra.mrb[0].mxu0 %v257
    %v321 = vpop.f32.mrb[0].mxu0
    %v322 = vadd.f32 %v209, %v321
    %v323 = vpop.f32.mrb[0].mxu0
    %v324 = vadd.f32 %v213, %v323
    %v325 = vpop.f32.mrb[0].mxu0
    %v326 = vadd.f32 %v209, %v325
    %v327 = vpop.f32.mrb[0].mxu0
    %v328 = vadd.f32 %v213, %v327
    %329 = vmatprep.mubr.bf16.mxu0 0
    %330 = vmatmul.mubr.bf16.gmra.mrb[0].mxu0 %v260
    %v331 = vpop.f32.mrb[0].mxu0
    %v332 = vadd.f32 %v209, %v331
    %v333 = vpop.f32.mrb[0].mxu0
    %v334 = vadd.f32 %v213, %v333
    %v335 = vpop.f32.mrb[0].mxu0
    %v336 = vadd.f32 %v209, %v335
    %v337 = vpop.f32.mrb[0].mxu0
    %v338 = vadd.f32 %v213, %v337
    %339 = vmatprep.mubr.bf16.mxu0 0
    %340 = vmatmul.mubr.bf16.gmra.mrb[0].mxu0 %v263
    %v341 = vpop.f32.mrb[0].mxu0
    %v342 = vadd.f32 %v209, %v341
    %v343 = vpop.f32.mrb[0].mxu0
    %v344 = vadd.f32 %v213, %v343
    %v345 = vpop.f32.mrb[0].mxu0
    %v346 = vadd.f32 %v209, %v345
    %v347 = vpop.f32.mrb[0].mxu0
    %v348 = vadd.f32 %v213, %v347
    %349 = vmatprep.mubr.bf16.mxu0 0
    %350 = vmatmul.mubr.bf16.gmra.mrb[0].mxu0 %v266
    %v351 = vpop.f32.mrb[0].mxu0
    %v352 = vadd.f32 %v209, %v351
    %v353 = vpop.f32.mrb[0].mxu0
    %v354 = vadd.f32 %v213, %v353
    %v355 = vpop.f32.mrb[0].mxu0
    %v356 = vadd.f32 %v209, %v355
    %v357 = vpop.f32.mrb[0].mxu0
    %v358 = vadd.f32 %v213, %v357
    %359 = vmatprep.mubr.bf16.mxu0 0
    %360 = vmatmul.mubr.bf16.gmra.mrb[0].mxu0 %v269
    %v361 = vpop.f32.mrb[0].mxu0
    %v362 = vadd.f32 %v209, %v361
    %v363 = vpop.f32.mrb[0].mxu0
    %v364 = vadd.f32 %v213, %v363
    %v365 = vpop.f32.mrb[0].mxu0
    %v366 = vadd.f32 %v209, %v365
    %v367 = vpop.f32.mrb[0].mxu0
    %v368 = vadd.f32 %v213, %v367
    %369 = vmatprep.mubr.bf16.mxu0 0
    %370 = vmatmul.mubr.bf16.gmra.mrb[0].mxu0 %v272
    %v371 = vpop.f32.mrb[0].mxu0
    %v372 = vadd.f32 %v209, %v371
    %v373 = vpop.f32.mrb[0].mxu0
    %v374 = vadd.f32 %v213, %v373
    %v375 = vpop.f32.mrb[0].mxu0
    %v376 = vadd.f32 %v209, %v375
    %v377 = vpop.f32.mrb[0].mxu0
    %v378 = vadd.f32 %v213, %v377
    %379 = vmatprep.mubr.bf16.mxu0 0
    %380 = vmatmul.mubr.bf16.gmra.mrb[0].mxu0 %v275
    %v381 = vpop.f32.mrb[0].mxu0
    %v382 = vadd.f32 %v209, %v381
    %v383 = vpop.f32.mrb[0].mxu0
    %v384 = vadd.f32 %v213, %v383
    %v385 = vpop.f32.mrb[0].mxu0
    %v386 = vadd.f32 %v209, %v385
    %v387 = vpop.f32.mrb[0].mxu0
    %v388 = vadd.f32 %v213, %v387
    %389 = vdwg.mxu0
    %390 = vmatprep.subr.bf16.mxu0 0
    %391 = vmatpush1.bf16.msra.mxu0 %v243
    %392 = vmatprep.subr.bf16.mxu0 0
    %393 = vmatpush1.bf16.msra.mxu0 %v246
    %394 = vmatprep.subr.bf16.mxu0 0
    %395 = vmatpush1.bf16.msra.mxu0 0
    %396 = vmatprep.subr.bf16.mxu0 0
    %397 = vmatpush1.bf16.msra.mxu0 0
    %398 = vmatprep.subr.bf16.mxu0 0
    %399 = vmatpush1.bf16.msra.mxu0 0
    %400 = vmatprep.subr.bf16.mxu0 0
    %401 = vmatpush1.bf16.msra.mxu0 0
    %402 = vmatprep.subr.bf16.mxu0 0
    %403 = vmatpush1.bf16.msra.mxu0 0
    %404 = vmatprep.subr.bf16.mxu0 0
    %405 = vmatpush1.bf16.msra.mxu0 0
    %406 = vmatprep.subr.bf16.mxu0 0
    %407 = vmatpush1.bf16.msra.mxu0 0
    %408 = vmatprep.subr.bf16.mxu0 0
    %409 = vmatpush1.bf16.msra.mxu0 0
    %410 = vmatprep.subr.bf16.mxu0 0
    %411 = vmatpush1.bf16.msra.mxu0 0
    %412 = vmatprep.subr.bf16.mxu0 0
    %413 = vmatpush1.bf16.msra.mxu0 0
    %414 = vmatprep.subr.bf16.mxu0 0
    %415 = vmatpush1.bf16.msra.mxu0 0
    %416 = vmatprep.subr.bf16.mxu0 0
    %417 = vmatpush1.bf16.msra.mxu0 0
    %418 = vmatprep.subr.bf16.mxu0 0
    %419 = vmatpush1.bf16.msra.mxu0 0
    %420 = vmatprep.subr.bf16.mxu0 0
    %421 = vmatpush1.bf16.msra.mxu0 0
    %422 = vmatprep.mubr.bf16.mxu0 0
    %423 = vmatmul.mubr.bf16.gmra.mrb[0].mxu0 %v254
    %v424 = vpop.f32.mrb[0].mxu0
    %v425 = vadd.f32 %v217, %v424
    %v426 = vpop.f32.mrb[0].mxu0
    %v427 = vpop.f32.mrb[0].mxu0
    %v428 = vadd.f32 %v217, %v427
    %v429 = vpop.f32.mrb[0].mxu0
    %430 = vmatprep.mubr.bf16.mxu0 0
    %431 = vmatmul.mubr.bf16.gmra.mrb[0].mxu0 %v257
    %v432 = vpop.f32.mrb[0].mxu0
    %v433 = vadd.f32 %v217, %v432
    %v434 = vpop.f32.mrb[0].mxu0
    %v435 = vpop.f32.mrb[0].mxu0
    %v436 = vadd.f32 %v217, %v435
    %v437 = vpop.f32.mrb[0].mxu0
    %438 = vmatprep.mubr.bf16.mxu0 0
    %439 = vmatmul.mubr.bf16.gmra.mrb[0].mxu0 %v260
    %v440 = vpop.f32.mrb[0].mxu0
    %v441 = vadd.f32 %v217, %v440
    %v442 = vpop.f32.mrb[0].mxu0
    %v443 = vpop.f32.mrb[0].mxu0
    %v444 = vadd.f32 %v217, %v443
    %v445 = vpop.f32.mrb[0].mxu0
    %446 = vmatprep.mubr.bf16.mxu0 0
    %447 = vmatmul.mubr.bf16.gmra.mrb[0].mxu0 %v263
    %v448 = vpop.f32.mrb[0].mxu0
    %v449 = vadd.f32 %v217, %v448
    %v450 = vpop.f32.mrb[0].mxu0
    %v451 = vpop.f32.mrb[0].mxu0
    %v452 = vadd.f32 %v217, %v451
    %v453 = vpop.f32.mrb[0].mxu0
    %454 = vmatprep.mubr.bf16.mxu0 0
    %455 = vmatmul.mubr.bf16.gmra.mrb[0].mxu0 %v266
    %v456 = vpop.f32.mrb[0].mxu0
    %v457 = vadd.f32 %v217, %v456
    %v458 = vpop.f32.mrb[0].mxu0
    %v459 = vpop.f32.mrb[0].mxu0
    %v460 = vadd.f32 %v217, %v459
    %v461 = vpop.f32.mrb[0].mxu0
    %462 = vmatprep.mubr.bf16.mxu0 0
    %463 = vmatmul.mubr.bf16.gmra.mrb[0].mxu0 %v269
    %v464 = vpop.f32.mrb[0].mxu0
    %v465 = vadd.f32 %v217, %v464
    %v466 = vpop.f32.mrb[0].mxu0
    %v467 = vpop.f32.mrb[0].mxu0
    %v468 = vadd.f32 %v217, %v467
    %v469 = vpop.f32.mrb[0].mxu0
    %470 = vmatprep.mubr.bf16.mxu0 0
    %471 = vmatmul.mubr.bf16.gmra.mrb[0].mxu0 %v272
    %v472 = vpop.f32.mrb[0].mxu0
    %v473 = vadd.f32 %v217, %v472
    %v474 = vpop.f32.mrb[0].mxu0
    %v475 = vpop.f32.mrb[0].mxu0
    %v476 = vadd.f32 %v217, %v475
    %v477 = vpop.f32.mrb[0].mxu0
    %478 = vmatprep.mubr.bf16.mxu0 0
    %479 = vmatmul.mubr.bf16.gmra.mrb[0].mxu0 %v275
    %v480 = vpop.f32.mrb[0].mxu0
    %v481 = vadd.f32 %v217, %v480
    %v482 = vpop.f32.mrb[0].mxu0
    %v483 = vpop.f32.mrb[0].mxu0
    %v484 = vadd.f32 %v217, %v483
    %v485 = vpop.f32.mrb[0].mxu0
    %486 = vdwg.mxu0
    %vm487 = vcmp.gt.f32.partialorder %v312, 0.0
    %vm488 = vcmp.gt.f32.partialorder %v314, 0.0
    %vm489 = vcmp.gt.f32.partialorder %v425, 0.0
    %vm490 = vcmp.gt.f32.partialorder %v316, 0.0
    %vm491 = vcmp.gt.f32.partialorder %v318, 0.0
    %vm492 = vcmp.gt.f32.partialorder %v428, 0.0
    %vm493 = vcmp.gt.f32.partialorder %v322, 0.0
    %vm494 = vcmp.gt.f32.partialorder %v324, 0.0
    %vm495 = vcmp.gt.f32.partialorder %v433, 0.0
    %vm496 = vcmp.gt.f32.partialorder %v326, 0.0
    %vm497 = vcmp.gt.f32.partialorder %v328, 0.0
    %vm498 = vcmp.gt.f32.partialorder %v436, 0.0
    %vm499 = vcmp.gt.f32.partialorder %v332, 0.0
    %vm500 = vcmp.gt.f32.partialorder %v334, 0.0
    %vm501 = vcmp.gt.f32.partialorder %v441, 0.0
    %vm502 = vcmp.gt.f32.partialorder %v336, 0.0
    %vm503 = vcmp.gt.f32.partialorder %v338, 0.0
    %vm504 = vcmp.gt.f32.partialorder %v444, 0.0
    %vm505 = vcmp.gt.f32.partialorder %v342, 0.0
    %vm506 = vcmp.gt.f32.partialorder %v344, 0.0
    %vm507 = vcmp.gt.f32.partialorder %v449, 0.0
    %vm508 = vcmp.gt.f32.partialorder %v346, 0.0
    %vm509 = vcmp.gt.f32.partialorder %v348, 0.0
    %vm510 = vcmp.gt.f32.partialorder %v452, 0.0
    %vm511 = vcmp.gt.f32.partialorder %v352, 0.0
    %vm512 = vcmp.gt.f32.partialorder %v354, 0.0
    %vm513 = vcmp.gt.f32.partialorder %v457, 0.0
    %vm514 = vcmp.gt.f32.partialorder %v356, 0.0
    %vm515 = vcmp.gt.f32.partialorder %v358, 0.0
    %vm516 = vcmp.gt.f32.partialorder %v460, 0.0
    %vm517 = vcmp.gt.f32.partialorder %v362, 0.0
    %vm518 = vcmp.gt.f32.partialorder %v364, 0.0
    %vm519 = vcmp.gt.f32.partialorder %v465, 0.0
    %vm520 = vcmp.gt.f32.partialorder %v366, 0.0
    %vm521 = vcmp.gt.f32.partialorder %v368, 0.0
    %vm522 = vcmp.gt.f32.partialorder %v468, 0.0
    %vm523 = vcmp.gt.f32.partialorder %v372, 0.0
    %vm524 = vcmp.gt.f32.partialorder %v374, 0.0
    %vm525 = vcmp.gt.f32.partialorder %v473, 0.0
    %vm526 = vcmp.gt.f32.partialorder %v376, 0.0
    %vm527 = vcmp.gt.f32.partialorder %v378, 0.0
    %vm528 = vcmp.gt.f32.partialorder %v476, 0.0
    %vm529 = vcmp.gt.f32.partialorder %v382, 0.0
    %vm530 = vcmp.gt.f32.partialorder %v384, 0.0
    %vm531 = vcmp.gt.f32.partialorder %v481, 0.0
    %vm532 = vcmp.gt.f32.partialorder %v386, 0.0
    %vm533 = vcmp.gt.f32.partialorder %v388, 0.0
    %vm534 = vcmp.gt.f32.partialorder %v484, 0.0
    %v535 = vmin.f32 %v312, 0.0
    %v536 = vmin.f32 %v314, 0.0
    %v537 = vmin.f32 %v425, 0.0
    %v538 = vmin.f32 %v316, 0.0
    %v539 = vmin.f32 %v318, 0.0
    %v540 = vmin.f32 %v428, 0.0
    %v541 = vmin.f32 %v322, 0.0
    %v542 = vmin.f32 %v324, 0.0
    %v543 = vmin.f32 %v433, 0.0
    %v544 = vmin.f32 %v326, 0.0
    %v545 = vmin.f32 %v328, 0.0
    %v546 = vmin.f32 %v436, 0.0
    %v547 = vmin.f32 %v332, 0.0
    %v548 = vmin.f32 %v334, 0.0
    %v549 = vmin.f32 %v441, 0.0
    %v550 = vmin.f32 %v336, 0.0
    %v551 = vmin.f32 %v338, 0.0
    %v552 = vmin.f32 %v444, 0.0
    %v553 = vmin.f32 %v342, 0.0
    %v554 = vmin.f32 %v344, 0.0
    %v555 = vmin.f32 %v449, 0.0
    %v556 = vmin.f32 %v346, 0.0
    %v557 = vmin.f32 %v348, 0.0
    %v558 = vmin.f32 %v452, 0.0
    %v559 = vmin.f32 %v352, 0.0
    %v560 = vmin.f32 %v354, 0.0
    %v561 = vmin.f32 %v457, 0.0
    %v562 = vmin.f32 %v356, 0.0
    %v563 = vmin.f32 %v358, 0.0
    %v564 = vmin.f32 %v460, 0.0
    %v565 = vmin.f32 %v362, 0.0
    %v566 = vmin.f32 %v364, 0.0
    %v567 = vmin.f32 %v465, 0.0
    %v568 = vmin.f32 %v366, 0.0
    %v569 = vmin.f32 %v368, 0.0
    %v570 = vmin.f32 %v468, 0.0
    %v571 = vmin.f32 %v372, 0.0
    %v572 = vmin.f32 %v374, 0.0
    %v573 = vmin.f32 %v473, 0.0
    %v574 = vmin.f32 %v376, 0.0
    %v575 = vmin.f32 %v378, 0.0
    %v576 = vmin.f32 %v476, 0.0
    %v577 = vmin.f32 %v382, 0.0
    %v578 = vmin.f32 %v384, 0.0
    %v579 = vmin.f32 %v481, 0.0
    %v580 = vmin.f32 %v386, 0.0
    %v581 = vmin.f32 %v388, 0.0
    %v582 = vmin.f32 %v484, 0.0
    %v583 = vmul.f32 %v535, 1.442695
    %v584 = vpow.pop %v583
    %v585 = vmul.f32 %v536, 1.442695
    %v586 = vpow.pop %v585
    %v587 = vmul.f32 %v537, 1.442695
    %v588 = vpow.pop %v587
    %v589 = vmul.f32 %v538, 1.442695
    %v590 = vpow.pop %v589
    %v591 = vmul.f32 %v539, 1.442695
    %v592 = vpow.pop %v591
    %v593 = vmul.f32 %v540, 1.442695
    %v594 = vpow.pop %v593
    %v595 = vmul.f32 %v541, 1.442695
    %v596 = vpow.pop %v595
    %v597 = vmul.f32 %v542, 1.442695
    %v598 = vpow.pop %v597
    %v599 = vmul.f32 %v543, 1.442695
    %v600 = vpow.pop %v599
    %v601 = vmul.f32 %v544, 1.442695
    %v602 = vpow.pop %v601
    %v603 = vmul.f32 %v545, 1.442695
    %v604 = vpow.pop %v603
    %v605 = vmul.f32 %v546, 1.442695
    %v606 = vpow.pop %v605
    %v607 = vmul.f32 %v547, 1.442695
    %v608 = vpow.pop %v607
    %v609 = vmul.f32 %v548, 1.442695
    %v610 = vpow.pop %v609
    %v611 = vmul.f32 %v549, 1.442695
    %v612 = vpow.pop %v611
    %v613 = vmul.f32 %v550, 1.442695
    %v614 = vpow.pop %v613
    %v615 = vmul.f32 %v551, 1.442695
    %v616 = vpow.pop %v615
    %v617 = vmul.f32 %v552, 1.442695
    %v618 = vpow.pop %v617
    %v619 = vmul.f32 %v553, 1.442695
    %v620 = vpow.pop %v619
    %v621 = vmul.f32 %v554, 1.442695
    %v622 = vpow.pop %v621
    %v623 = vmul.f32 %v555, 1.442695
    %v624 = vpow.pop %v623
    %v625 = vmul.f32 %v556, 1.442695
    %v626 = vpow.pop %v625
    %v627 = vmul.f32 %v557, 1.442695
    %v628 = vpow.pop %v627
    %v629 = vmul.f32 %v558, 1.442695
    %v630 = vpow.pop %v629
    %v631 = vmul.f32 %v559, 1.442695
    %v632 = vpow.pop %v631
    %v633 = vmul.f32 %v560, 1.442695
    %v634 = vpow.pop %v633
    %v635 = vmul.f32 %v561, 1.442695
    %v636 = vpow.pop %v635
    %v637 = vmul.f32 %v562, 1.442695
    %v638 = vpow.pop %v637
    %v639 = vmul.f32 %v563, 1.442695
    %v640 = vpow.pop %v639
    %v641 = vmul.f32 %v564, 1.442695
    %v642 = vpow.pop %v641
    %v643 = vmul.f32 %v565, 1.442695
    %v644 = vpow.pop %v643
    %v645 = vmul.f32 %v566, 1.442695
    %v646 = vpow.pop %v645
    %v647 = vmul.f32 %v567, 1.442695
    %v648 = vpow.pop %v647
    %v649 = vmul.f32 %v568, 1.442695
    %v650 = vpow.pop %v649
    %v651 = vmul.f32 %v569, 1.442695
    %v652 = vpow.pop %v651
    %v653 = vmul.f32 %v570, 1.442695
    %v654 = vpow.pop %v653
    %v655 = vmul.f32 %v571, 1.442695
    %v656 = vpow.pop %v655
    %v657 = vmul.f32 %v572, 1.442695
    %v658 = vpow.pop %v657
    %v659 = vmul.f32 %v573, 1.442695
    %v660 = vpow.pop %v659
    %v661 = vmul.f32 %v574, 1.442695
    %v662 = vpow.pop %v661
    %v663 = vmul.f32 %v575, 1.442695
    %v664 = vpow.pop %v663
    %v665 = vmul.f32 %v576, 1.442695
    %v666 = vpow.pop %v665
    %v667 = vmul.f32 %v577, 1.442695
    %v668 = vpow.pop %v667
    %v669 = vmul.f32 %v578, 1.442695
    %v670 = vpow.pop %v669
    %v671 = vmul.f32 %v579, 1.442695
    %v672 = vpow.pop %v671
    %v673 = vmul.f32 %v580, 1.442695
    %v674 = vpow.pop %v673
    %v675 = vmul.f32 %v581, 1.442695
    %v676 = vpow.pop %v675
    %v677 = vmul.f32 %v582, 1.442695
    %v678 = vpow.pop %v677
    %v679 = vsub.f32 %v584, 1.0
    %v680 = vsub.f32 %v586, 1.0
    %v681 = vsub.f32 %v588, 1.0
    %v682 = vsub.f32 %v590, 1.0
    %v683 = vsub.f32 %v592, 1.0
    %v684 = vsub.f32 %v594, 1.0
    %v685 = vsub.f32 %v596, 1.0
    %v686 = vsub.f32 %v598, 1.0
    %v687 = vsub.f32 %v600, 1.0
    %v688 = vsub.f32 %v602, 1.0
    %v689 = vsub.f32 %v604, 1.0
    %v690 = vsub.f32 %v606, 1.0
    %v691 = vsub.f32 %v608, 1.0
    %v692 = vsub.f32 %v610, 1.0
    %v693 = vsub.f32 %v612, 1.0
    %v694 = vsub.f32 %v614, 1.0
    %v695 = vsub.f32 %v616, 1.0
    %v696 = vsub.f32 %v618, 1.0
    %v697 = vsub.f32 %v620, 1.0
    %v698 = vsub.f32 %v622, 1.0
    %v699 = vsub.f32 %v624, 1.0
    %v700 = vsub.f32 %v626, 1.0
    %v701 = vsub.f32 %v628, 1.0
    %v702 = vsub.f32 %v630, 1.0
    %v703 = vsub.f32 %v632, 1.0
    %v704 = vsub.f32 %v634, 1.0
    %v705 = vsub.f32 %v636, 1.0
    %v706 = vsub.f32 %v638, 1.0
    %v707 = vsub.f32 %v640, 1.0
    %v708 = vsub.f32 %v642, 1.0
    %v709 = vsub.f32 %v644, 1.0
    %v710 = vsub.f32 %v646, 1.0
    %v711 = vsub.f32 %v648, 1.0
    %v712 = vsub.f32 %v650, 1.0
    %v713 = vsub.f32 %v652, 1.0
    %v714 = vsub.f32 %v654, 1.0
    %v715 = vsub.f32 %v656, 1.0
    %v716 = vsub.f32 %v658, 1.0
    %v717 = vsub.f32 %v660, 1.0
    %v718 = vsub.f32 %v662, 1.0
    %v719 = vsub.f32 %v664, 1.0
    %v720 = vsub.f32 %v666, 1.0
    %v721 = vsub.f32 %v668, 1.0
    %v722 = vsub.f32 %v670, 1.0
    %v723 = vsub.f32 %v672, 1.0
    %v724 = vsub.f32 %v674, 1.0
    %v725 = vsub.f32 %v676, 1.0
    %v726 = vsub.f32 %v678, 1.0
    %v727 = vsel %vm487, %v312, %v679
    %v728 = vsel %vm488, %v314, %v680
    %v729 = vsel %vm489, %v425, %v681
    %v730 = vsel %vm490, %v316, %v682
    %v731 = vsel %vm491, %v318, %v683
    %v732 = vsel %vm492, %v428, %v684
    %v733 = vsel %vm493, %v322, %v685
    %v734 = vsel %vm494, %v324, %v686
    %v735 = vsel %vm495, %v433, %v687
    %v736 = vsel %vm496, %v326, %v688
    %v737 = vsel %vm497, %v328, %v689
    %v738 = vsel %vm498, %v436, %v690
    %v739 = vsel %vm499, %v332, %v691
    %v740 = vsel %vm500, %v334, %v692
    %v741 = vsel %vm501, %v441, %v693
    %v742 = vsel %vm502, %v336, %v694
    %v743 = vsel %vm503, %v338, %v695
    %v744 = vsel %vm504, %v444, %v696
    %v745 = vsel %vm505, %v342, %v697
    %v746 = vsel %vm506, %v344, %v698
    %v747 = vsel %vm507, %v449, %v699
    %v748 = vsel %vm508, %v346, %v700
    %v749 = vsel %vm509, %v348, %v701
    %v750 = vsel %vm510, %v452, %v702
    %v751 = vsel %vm511, %v352, %v703
    %v752 = vsel %vm512, %v354, %v704
    %v753 = vsel %vm513, %v457, %v705
    %v754 = vsel %vm514, %v356, %v706
    %v755 = vsel %vm515, %v358, %v707
    %v756 = vsel %vm516, %v460, %v708
    %v757 = vsel %vm517, %v362, %v709
    %v758 = vsel %vm518, %v364, %v710
    %v759 = vsel %vm519, %v465, %v711
    %v760 = vsel %vm520, %v366, %v712
    %v761 = vsel %vm521, %v368, %v713
    %v762 = vsel %vm522, %v468, %v714
    %v763 = vsel %vm523, %v372, %v715
    %v764 = vsel %vm524, %v374, %v716
    %v765 = vsel %vm525, %v473, %v717
    %v766 = vsel %vm526, %v376, %v718
    %v767 = vsel %vm527, %v378, %v719
    %v768 = vsel %vm528, %v476, %v720
    %v769 = vsel %vm529, %v382, %v721
    %v770 = vsel %vm530, %v384, %v722
    %v771 = vsel %vm531, %v481, %v723
    %v772 = vsel %vm532, %v386, %v724
    %v773 = vsel %vm533, %v388, %v725
    %v774 = vsel %vm534, %v484, %v726
    %v775 = vadd.f32 %v727, %v730
    %v776 = vadd.f32 %v775, %v733
    %v777 = vadd.f32 %v776, %v736
    %v778 = vadd.f32 %v777, %v739
    %v779 = vadd.f32 %v778, %v742
    %v780 = vadd.f32 %v779, %v745
    %v781 = vadd.f32 %v780, %v748
    %v782 = vadd.f32 %v781, %v751
    %v783 = vadd.f32 %v782, %v754
    %v784 = vadd.f32 %v783, %v757
    %v785 = vadd.f32 %v784, %v760
    %v786 = vadd.f32 %v785, %v763
    %v787 = vadd.f32 %v786, %v766
    %v788 = vadd.f32 %v787, %v769
    %v789 = vadd.f32 %v788, %v772
    %v790 = vrot.slane %v789, 4
    %v791 = vadd.f32 %v789, %v790
    %v792 = vrot.slane %v791, 2
    %v793 = vadd.f32 %v791, %v792
    %v794 = vrot.slane %v793, 1
    %v795 = vadd.f32 %v793, %v794
    %v796 = vadd.f32 %v728, %v731
    %v797 = vadd.f32 %v796, %v734
    %v798 = vadd.f32 %v797, %v737
    %v799 = vadd.f32 %v798, %v740
    %v800 = vadd.f32 %v799, %v743
    %v801 = vadd.f32 %v800, %v746
    %v802 = vadd.f32 %v801, %v749
    %v803 = vadd.f32 %v802, %v752
    %v804 = vadd.f32 %v803, %v755
    %v805 = vadd.f32 %v804, %v758
    %v806 = vadd.f32 %v805, %v761
    %v807 = vadd.f32 %v806, %v764
    %v808 = vadd.f32 %v807, %v767
    %v809 = vadd.f32 %v808, %v770
    %v810 = vadd.f32 %v809, %v773
    %v811 = vrot.slane %v810, 4
    %v812 = vadd.f32 %v810, %v811
    %v813 = vrot.slane %v812, 2
    %v814 = vadd.f32 %v812, %v813
    %v815 = vrot.slane %v814, 1
    %v816 = vadd.f32 %v814, %v815
    %vm817 = vcmask 359424
    %v818 = vsel %vm817, %v729, 0.0
    %v819 = vsel %vm817, %v732, 0.0
    %v820 = vadd.f32 %v818, %v819
    %v821 = vsel %vm817, %v735, 0.0
    %v822 = vadd.f32 %v820, %v821
    %v823 = vsel %vm817, %v738, 0.0
    %v824 = vadd.f32 %v822, %v823
    %v825 = vsel %vm817, %v741, 0.0
    %v826 = vadd.f32 %v824, %v825
    %v827 = vsel %vm817, %v744, 0.0
    %v828 = vadd.f32 %v826, %v827
    %v829 = vsel %vm817, %v747, 0.0
    %v830 = vadd.f32 %v828, %v829
    %v831 = vsel %vm817, %v750, 0.0
    %v832 = vadd.f32 %v830, %v831
    %v833 = vsel %vm817, %v753, 0.0
    %v834 = vadd.f32 %v832, %v833
    %v835 = vsel %vm817, %v756, 0.0
    %v836 = vadd.f32 %v834, %v835
    %v837 = vsel %vm817, %v759, 0.0
    %v838 = vadd.f32 %v836, %v837
    %v839 = vsel %vm817, %v762, 0.0
    %v840 = vadd.f32 %v838, %v839
    %v841 = vsel %vm817, %v765, 0.0
    %v842 = vadd.f32 %v840, %v841
    %v843 = vsel %vm817, %v768, 0.0
    %v844 = vadd.f32 %v842, %v843
    %v845 = vsel %vm817, %v771, 0.0
    %v846 = vadd.f32 %v844, %v845
    %v847 = vsel %vm817, %v774, 0.0
    %v848 = vadd.f32 %v846, %v847
    %v849 = vrot.slane %v848, 4
    %v850 = vadd.f32 %v848, %v849
    %v851 = vrot.slane %v850, 2
    %v852 = vadd.f32 %v850, %v851
    %v853 = vrot.slane %v852, 1
    %v854 = vadd.f32 %v852, %v853
    %v855 = vmul.f32 %v727, %v727
    %v856 = vmul.f32 %v728, %v728
    %v857 = vmul.f32 %v729, %v729
    %v858 = vmul.f32 %v730, %v730
    %v859 = vmul.f32 %v731, %v731
    %v860 = vmul.f32 %v732, %v732
    %v861 = vmul.f32 %v733, %v733
    %v862 = vmul.f32 %v734, %v734
    %v863 = vmul.f32 %v735, %v735
    %v864 = vmul.f32 %v736, %v736
    %v865 = vmul.f32 %v737, %v737
    %v866 = vmul.f32 %v738, %v738
    %v867 = vmul.f32 %v739, %v739
    %v868 = vmul.f32 %v740, %v740
    %v869 = vmul.f32 %v741, %v741
    %v870 = vmul.f32 %v742, %v742
    %v871 = vmul.f32 %v743, %v743
    %v872 = vmul.f32 %v744, %v744
    %v873 = vmul.f32 %v745, %v745
    %v874 = vmul.f32 %v746, %v746
    %v875 = vmul.f32 %v747, %v747
    %v876 = vmul.f32 %v748, %v748
    %v877 = vmul.f32 %v749, %v749
    %v878 = vmul.f32 %v750, %v750
    %v879 = vmul.f32 %v751, %v751
    %v880 = vmul.f32 %v752, %v752
    %v881 = vmul.f32 %v753, %v753
    %v882 = vmul.f32 %v754, %v754
    %v883 = vmul.f32 %v755, %v755
    %v884 = vmul.f32 %v756, %v756
    %v885 = vmul.f32 %v757, %v757
    %v886 = vmul.f32 %v758, %v758
    %v887 = vmul.f32 %v759, %v759
    %v888 = vmul.f32 %v760, %v760
    %v889 = vmul.f32 %v761, %v761
    %v890 = vmul.f32 %v762, %v762
    %v891 = vmul.f32 %v763, %v763
    %v892 = vmul.f32 %v764, %v764
    %v893 = vmul.f32 %v765, %v765
    %v894 = vmul.f32 %v766, %v766
    %v895 = vmul.f32 %v767, %v767
    %v896 = vmul.f32 %v768, %v768
    %v897 = vmul.f32 %v769, %v769
    %v898 = vmul.f32 %v770, %v770
    %v899 = vmul.f32 %v771, %v771
    %v900 = vmul.f32 %v772, %v772
    %v901 = vmul.f32 %v773, %v773
    %v902 = vmul.f32 %v774, %v774
    %v903 = vadd.f32 %v855, %v858
    %v904 = vadd.f32 %v903, %v861
    %v905 = vadd.f32 %v904, %v864
    %v906 = vadd.f32 %v905, %v867
    %v907 = vadd.f32 %v906, %v870
    %v908 = vadd.f32 %v907, %v873
    %v909 = vadd.f32 %v908, %v876
    %v910 = vadd.f32 %v909, %v879
    %v911 = vadd.f32 %v910, %v882
    %v912 = vadd.f32 %v911, %v885
    %v913 = vadd.f32 %v912, %v888
    %v914 = vadd.f32 %v913, %v891
    %v915 = vadd.f32 %v914, %v894
    %v916 = vadd.f32 %v915, %v897
    %v917 = vadd.f32 %v916, %v900
    %v918 = vrot.slane %v917, 4
    %v919 = vadd.f32 %v917, %v918
    %v920 = vrot.slane %v919, 2
    %v921 = vadd.f32 %v919, %v920
    %v922 = vrot.slane %v921, 1
    %v923 = vadd.f32 %v921, %v922
    %v924 = vadd.f32 %v856, %v859
    %v925 = vadd.f32 %v924, %v862
    %v926 = vadd.f32 %v925, %v865
    %v927 = vadd.f32 %v926, %v868
    %v928 = vadd.f32 %v927, %v871
    %v929 = vadd.f32 %v928, %v874
    %v930 = vadd.f32 %v929, %v877
    %v931 = vadd.f32 %v930, %v880
    %v932 = vadd.f32 %v931, %v883
    %v933 = vadd.f32 %v932, %v886
    %v934 = vadd.f32 %v933, %v889
    %v935 = vadd.f32 %v934, %v892
    %v936 = vadd.f32 %v935, %v895
    %v937 = vadd.f32 %v936, %v898
    %v938 = vadd.f32 %v937, %v901
    %v939 = vrot.slane %v938, 4
    %v940 = vadd.f32 %v938, %v939
    %v941 = vrot.slane %v940, 2
    %v942 = vadd.f32 %v940, %v941
    %v943 = vrot.slane %v942, 1
    %v944 = vadd.f32 %v942, %v943
    %v945 = vsel %vm817, %v857, 0.0
    %v946 = vsel %vm817, %v860, 0.0
    %v947 = vadd.f32 %v945, %v946
    %v948 = vsel %vm817, %v863, 0.0
    %v949 = vadd.f32 %v947, %v948
    %v950 = vsel %vm817, %v866, 0.0
    %v951 = vadd.f32 %v949, %v950
    %v952 = vsel %vm817, %v869, 0.0
    %v953 = vadd.f32 %v951, %v952
    %v954 = vsel %vm817, %v872, 0.0
    %v955 = vadd.f32 %v953, %v954
    %v956 = vsel %vm817, %v875, 0.0
    %v957 = vadd.f32 %v955, %v956
    %v958 = vsel %vm817, %v878, 0.0
    %v959 = vadd.f32 %v957, %v958
    %v960 = vsel %vm817, %v881, 0.0
    %v961 = vadd.f32 %v959, %v960
    %v962 = vsel %vm817, %v884, 0.0
    %v963 = vadd.f32 %v961, %v962
    %v964 = vsel %vm817, %v887, 0.0
    %v965 = vadd.f32 %v963, %v964
    %v966 = vsel %vm817, %v890, 0.0
    %v967 = vadd.f32 %v965, %v966
    %v968 = vsel %vm817, %v893, 0.0
    %v969 = vadd.f32 %v967, %v968
    %v970 = vsel %vm817, %v896, 0.0
    %v971 = vadd.f32 %v969, %v970
    %v972 = vsel %vm817, %v899, 0.0
    %v973 = vadd.f32 %v971, %v972
    %v974 = vsel %vm817, %v902, 0.0
    %v975 = vadd.f32 %v973, %v974
    %v976 = vrot.slane %v975, 4
    %v977 = vadd.f32 %v975, %v976
    %v978 = vrot.slane %v977, 2
    %v979 = vadd.f32 %v977, %v978
    %v980 = vrot.slane %v979, 1
    %v981 = vadd.f32 %v979, %v980
    %v982 = vmul.f32 %v795, 0.0078125
    %v983 = vmul.f32 %v816, 0.0078125
    %v984 = vmul.f32 %v854, 0.0078125
    %v985 = vmul.f32 %v923, 0.0078125
    %v986 = vmul.f32 %v944, 0.0078125
    %v987 = vmul.f32 %v981, 0.0078125
    %v988 = vmul.f32 %v982, %v982
    %v989 = vmul.f32 %v983, %v983
    %v990 = vmul.f32 %v984, %v984
    %v991 = vsub.f32 %v985, %v988
    %v992 = vsub.f32 %v986, %v989
    %v993 = vsub.f32 %v987, %v990
    %v994 = vsub.f32 %v727, %v982
    %v995 = vsub.f32 %v728, %v983
    %v996 = vsub.f32 %v729, %v984
    %v997 = vsub.f32 %v730, %v982
    %v998 = vsub.f32 %v731, %v983
    %v999 = vsub.f32 %v732, %v984
    %v1000 = vsub.f32 %v733, %v982
    %v1001 = vsub.f32 %v734, %v983
    %v1002 = vsub.f32 %v735, %v984
    %v1003 = vsub.f32 %v736, %v982
    %v1004 = vsub.f32 %v737, %v983
    %v1005 = vsub.f32 %v738, %v984
    %v1006 = vsub.f32 %v739, %v982
    %v1007 = vsub.f32 %v740, %v983
    %v1008 = vsub.f32 %v741, %v984
    %v1009 = vsub.f32 %v742, %v982
    %v1010 = vsub.f32 %v743, %v983
    %v1011 = vsub.f32 %v744, %v984
    %v1012 = vsub.f32 %v745, %v982
    %v1013 = vsub.f32 %v746, %v983
    %v1014 = vsub.f32 %v747, %v984
    %v1015 = vsub.f32 %v748, %v982
    %v1016 = vsub.f32 %v749, %v983
    %v1017 = vsub.f32 %v750, %v984
    %v1018 = vsub.f32 %v751, %v982
    %v1019 = vsub.f32 %v752, %v983
    %v1020 = vsub.f32 %v753, %v984
    %v1021 = vsub.f32 %v754, %v982
    %v1022 = vsub.f32 %v755, %v983
    %v1023 = vsub.f32 %v756, %v984
    %v1024 = vsub.f32 %v757, %v982
    %v1025 = vsub.f32 %v758, %v983
    %v1026 = vsub.f32 %v759, %v984
    %v1027 = vsub.f32 %v760, %v982
    %v1028 = vsub.f32 %v761, %v983
    %v1029 = vsub.f32 %v762, %v984
    %v1030 = vsub.f32 %v763, %v982
    %v1031 = vsub.f32 %v764, %v983
    %v1032 = vsub.f32 %v765, %v984
    %v1033 = vsub.f32 %v766, %v982
    %v1034 = vsub.f32 %v767, %v983
    %v1035 = vsub.f32 %v768, %v984
    %v1036 = vsub.f32 %v769, %v982
    %v1037 = vsub.f32 %v770, %v983
    %v1038 = vsub.f32 %v771, %v984
    %v1039 = vsub.f32 %v772, %v982
    %v1040 = vsub.f32 %v773, %v983
    %v1041 = vsub.f32 %v774, %v984
    %v1042 = vadd.f32 %v991, 1e-05
    %v1043 = vadd.f32 %v992, 1e-05
    %v1044 = vadd.f32 %v993, 1e-05
    %v1045 = vrsqrt.pop %v1042
    %v1046 = vrsqrt.pop %v1043
    %v1047 = vrsqrt.pop %v1044
    %v1048 = vmul.f32 %v994, %v1045
    %v1049 = vmul.f32 %v995, %v1046
    %v1050 = vmul.f32 %v996, %v1047
    %v1051 = vmul.f32 %v997, %v1045
    %v1052 = vmul.f32 %v998, %v1046
    %v1053 = vmul.f32 %v999, %v1047
    %v1054 = vmul.f32 %v1000, %v1045
    %v1055 = vmul.f32 %v1001, %v1046
    %v1056 = vmul.f32 %v1002, %v1047
    %v1057 = vmul.f32 %v1003, %v1045
    %v1058 = vmul.f32 %v1004, %v1046
    %v1059 = vmul.f32 %v1005, %v1047
    %v1060 = vmul.f32 %v1006, %v1045
    %v1061 = vmul.f32 %v1007, %v1046
    %v1062 = vmul.f32 %v1008, %v1047
    %v1063 = vmul.f32 %v1009, %v1045
    %v1064 = vmul.f32 %v1010, %v1046
    %v1065 = vmul.f32 %v1011, %v1047
    %v1066 = vmul.f32 %v1012, %v1045
    %v1067 = vmul.f32 %v1013, %v1046
    %v1068 = vmul.f32 %v1014, %v1047
    %v1069 = vmul.f32 %v1015, %v1045
    %v1070 = vmul.f32 %v1016, %v1046
    %v1071 = vmul.f32 %v1017, %v1047
    %v1072 = vmul.f32 %v1018, %v1045
    %v1073 = vmul.f32 %v1019, %v1046
    %v1074 = vmul.f32 %v1020, %v1047
    %v1075 = vmul.f32 %v1021, %v1045
    %v1076 = vmul.f32 %v1022, %v1046
    %v1077 = vmul.f32 %v1023, %v1047
    %v1078 = vmul.f32 %v1024, %v1045
    %v1079 = vmul.f32 %v1025, %v1046
    %v1080 = vmul.f32 %v1026, %v1047
    %v1081 = vmul.f32 %v1027, %v1045
    %v1082 = vmul.f32 %v1028, %v1046
    %v1083 = vmul.f32 %v1029, %v1047
    %v1084 = vmul.f32 %v1030, %v1045
    %v1085 = vmul.f32 %v1031, %v1046
    %v1086 = vmul.f32 %v1032, %v1047
    %v1087 = vmul.f32 %v1033, %v1045
    %v1088 = vmul.f32 %v1034, %v1046
    %v1089 = vmul.f32 %v1035, %v1047
    %v1090 = vmul.f32 %v1036, %v1045
    %v1091 = vmul.f32 %v1037, %v1046
    %v1092 = vmul.f32 %v1038, %v1047
    %v1093 = vmul.f32 %v1039, %v1045
    %v1094 = vmul.f32 %v1040, %v1046
    %v1095 = vmul.f32 %v1041, %v1047
    %v1096 = vpack.c.bf16 %v1051, %v1048
    %v1097 = vpack.c.bf16 %v1052, %v1049
    %v1098 = vpack.c.bf16 %v1053, %v1050
    %v1099 = vpack.c.bf16 %v1057, %v1054
    %v1100 = vpack.c.bf16 %v1058, %v1055
    %v1101 = vpack.c.bf16 %v1059, %v1056
    %v1102 = vpack.c.bf16 %v1063, %v1060
    %v1103 = vpack.c.bf16 %v1064, %v1061
    %v1104 = vpack.c.bf16 %v1065, %v1062
    %v1105 = vpack.c.bf16 %v1069, %v1066
    %v1106 = vpack.c.bf16 %v1070, %v1067
    %v1107 = vpack.c.bf16 %v1071, %v1068
    %v1108 = vpack.c.bf16 %v1075, %v1072
    %v1109 = vpack.c.bf16 %v1076, %v1073
    %v1110 = vpack.c.bf16 %v1077, %v1074
    %v1111 = vpack.c.bf16 %v1081, %v1078
    %v1112 = vpack.c.bf16 %v1082, %v1079
    %v1113 = vpack.c.bf16 %v1083, %v1080
    %v1114 = vpack.c.bf16 %v1087, %v1084
    %v1115 = vpack.c.bf16 %v1088, %v1085
    %v1116 = vpack.c.bf16 %v1089, %v1086
    %v1117 = vpack.c.bf16 %v1093, %v1090
    %v1118 = vpack.c.bf16 %v1094, %v1091
    %v1119 = vpack.c.bf16 %v1095, %v1092
    %v1120 = vld [vmem:[#allocation3] sm:$0xff]
    %v1121 = vld [vmem:[#allocation3 + $0x8] sm:$0xf]
    %v1122 = vld [vmem:[#allocation3 + $0xc] sm:$0xff]
    %v1123 = vld [vmem:[#allocation3 + $0x14] sm:$0xf]
    %v1124 = vld [vmem:[#allocation3 + $0x18] sm:$0xff]
    %v1125 = vld [vmem:[#allocation3 + $0x20] sm:$0xf]
    %v1126 = vld [vmem:[#allocation3 + $0x24] sm:$0xff]
    %v1127 = vld [vmem:[#allocation3 + $0x2c] sm:$0xf]
    %v1128 = vld [vmem:[#allocation3 + $0x30] sm:$0xff]
    %v1129 = vld [vmem:[#allocation3 + $0x38] sm:$0xf]
    %v1130 = vld [vmem:[#allocation3 + $0x3c] sm:$0xff]
    %v1131 = vld [vmem:[#allocation3 + $0x44] sm:$0xf]
    %v1132 = vld [vmem:[#allocation3 + $0x48] sm:$0xff]
    %v1133 = vld [vmem:[#allocation3 + $0x50] sm:$0xf]
    %v1134 = vld [vmem:[#allocation3 + $0x54] sm:$0xff]
    %v1135 = vld [vmem:[#allocation3 + $0x5c] sm:$0xf]
    %v1136 = vld [vmem:[#allocation3 + $0x60] sm:$0xff]
    %v1137 = vld [vmem:[#allocation3 + $0x68] sm:$0xf]
    %v1138 = vld [vmem:[#allocation3 + $0x6c] sm:$0xff]
    %v1139 = vld [vmem:[#allocation3 + $0x74] sm:$0xf]
    %v1140 = vld [vmem:[#allocation3 + $0x78] sm:$0xff]
    %v1141 = vld [vmem:[#allocation3 + $0x80] sm:$0xf]
    %v1142 = vld [vmem:[#allocation3 + $0x84] sm:$0xff]
    %v1143 = vld [vmem:[#allocation3 + $0x8c] sm:$0xf]
    %v1144 = vld [vmem:[#allocation3 + $0x90] sm:$0xff]
    %v1145 = vld [vmem:[#allocation3 + $0x98] sm:$0xf]
    %v1146 = vld [vmem:[#allocation3 + $0x9c] sm:$0xff]
    %v1147 = vld [vmem:[#allocation3 + $0xa4] sm:$0xf]
    %v1148 = vld [vmem:[#allocation3 + $0xa8] sm:$0xff]
    %v1149 = vld [vmem:[#allocation3 + $0xb0] sm:$0xf]
    %v1150 = vld [vmem:[#allocation3 + $0xb4] sm:$0xff]
    %v1151 = vld [vmem:[#allocation3 + $0xbc] sm:$0xf]
    %v1152 = vld [vmem:[#allocation3 + $0xc0] sm:$0xff]
    %v1153 = vld [vmem:[#allocation3 + $0xc8] sm:$0xf]
    %v1154 = vld [vmem:[#allocation3 + $0xcc] sm:$0xff]
    %v1155 = vld [vmem:[#allocation3 + $0xd4] sm:$0xf]
    %v1156 = vld [vmem:[#allocation3 + $0xd8] sm:$0xff]
    %v1157 = vld [vmem:[#allocation3 + $0xe0] sm:$0xf]
    %v1158 = vld [vmem:[#allocation3 + $0xe4] sm:$0xff]
    %v1159 = vld [vmem:[#allocation3 + $0xec] sm:$0xf]
    %v1160 = vld [vmem:[#allocation3 + $0xf0] sm:$0xff]
    %v1161 = vld [vmem:[#allocation3 + $0xf8] sm:$0xf]
    %v1162 = vld [vmem:[#allocation3 + $0xfc] sm:$0xff]
    %v1163 = vld [vmem:[#allocation3 + $0x104] sm:$0xf]
    %v1164 = vld [vmem:[#allocation3 + $0x108] sm:$0xff]
    %v1165 = vld [vmem:[#allocation3 + $0x110] sm:$0xf]
    %v1166 = vld [vmem:[#allocation3 + $0x114] sm:$0xff]
    %v1167 = vld [vmem:[#allocation3 + $0x11c] sm:$0xf]
    %v1168 = vld [vmem:[#allocation3 + $0x120] sm:$0xff]
    %v1169 = vld [vmem:[#allocation3 + $0x128] sm:$0xf]
    %v1170 = vld [vmem:[#allocation3 + $0x12c] sm:$0xff]
    %v1171 = vld [vmem:[#allocation3 + $0x134] sm:$0xf]
    %v1172 = vld [vmem:[#allocation3 + $0x138] sm:$0xff]
    %v1173 = vld [vmem:[#allocation3 + $0x140] sm:$0xf]
    %v1174 = vld [vmem:[#allocation3 + $0x144] sm:$0xff]
    %v1175 = vld [vmem:[#allocation3 + $0x14c] sm:$0xf]
    %v1176 = vld [vmem:[#allocation3 + $0x150] sm:$0xff]
    %v1177 = vld [vmem:[#allocation3 + $0x158] sm:$0xf]
    %v1178 = vld [vmem:[#allocation3 + $0x15c] sm:$0xff]
    %v1179 = vld [vmem:[#allocation3 + $0x164] sm:$0xf]
    %v1180 = vld [vmem:[#allocation3 + $0x168] sm:$0xff]
    %v1181 = vld [vmem:[#allocation3 + $0x170] sm:$0xf]
    %v1182 = vld [vmem:[#allocation3 + $0x174] sm:$0xff]
    %v1183 = vld [vmem:[#allocation3 + $0x17c] sm:$0xf]
    %v1184 = vld [vmem:[#allocation3 + $0x180] sm:$0xff]
    %v1185 = vld [vmem:[#allocation3 + $0x188] sm:$0xf]
    %v1186 = vld [vmem:[#allocation3 + $0x18c] sm:$0xff]
    %v1187 = vld [vmem:[#allocation3 + $0x194] sm:$0xf]
    %v1188 = vld [vmem:[#allocation3 + $0x198] sm:$0xff]
    %v1189 = vld [vmem:[#allocation3 + $0x1a0] sm:$0xf]
    %v1190 = vld [vmem:[#allocation3 + $0x1a4] sm:$0xff]
    %v1191 = vld [vmem:[#allocation3 + $0x1ac] sm:$0xf]
    %v1192 = vld [vmem:[#allocation3 + $0x1b0] sm:$0xff]
    %v1193 = vld [vmem:[#allocation3 + $0x1b8] sm:$0xf]
    %v1194 = vld [vmem:[#allocation3 + $0x1bc] sm:$0x33]
    %v1195 = vld [vmem:[#allocation3 + $0x1c4] sm:$0x3]
    %v1196 = vld [vmem:[%s4] sm:$0x7]
    %v1198 = vlaneseq
    %v1199 = vshrl.u32 %v1198, 7
    %v1200 = vsub.s32 0, %v1199
    %v1201 = vrot.slane %v1196, %v1200
    %v1202 = vlaneseq
    %v1203 = vshrl.u32 %v1202, 7
    %v1204 = vsub.s32 1, %v1203
    %v1205 = vrot.slane %v1196, %v1204
    %v1206 = vlaneseq
    %v1207 = vshrl.u32 %v1206, 7
    %v1208 = vsub.s32 2, %v1207
    %v1209 = vrot.slane %v1196, %v1208
    %v1289 = vunpack.c.l.b16 %v1120
    %v1290 = vunpack.c.h.b16 %v1120
    %v1291 = vunpack.c.l.b16 %v1121
    %v1292 = vunpack.c.l.b16 %v1122
    %v1293 = vunpack.c.h.b16 %v1122
    %v1294 = vunpack.c.l.b16 %v1123
    %v1295 = vunpack.c.l.b16 %v1124
    %v1296 = vunpack.c.h.b16 %v1124
    %v1297 = vunpack.c.l.b16 %v1125
    %v1298 = vunpack.c.l.b16 %v1126
    %v1299 = vunpack.c.h.b16 %v1126
    %v1300 = vunpack.c.l.b16 %v1127
    %v1301 = vunpack.c.l.b16 %v1128
    %v1302 = vunpack.c.h.b16 %v1128
    %v1303 = vunpack.c.l.b16 %v1129
    %v1304 = vunpack.c.l.b16 %v1130
    %v1305 = vunpack.c.h.b16 %v1130
    %v1306 = vunpack.c.l.b16 %v1131
    %v1307 = vunpack.c.l.b16 %v1132
    %v1308 = vunpack.c.h.b16 %v1132
    %v1309 = vunpack.c.l.b16 %v1133
    %v1310 = vunpack.c.l.b16 %v1134
    %v1311 = vunpack.c.h.b16 %v1134
    %v1312 = vunpack.c.l.b16 %v1135
    %v1313 = vunpack.c.l.b16 %v1136
    %v1314 = vunpack.c.h.b16 %v1136
    %v1315 = vunpack.c.l.b16 %v1137
    %v1316 = vunpack.c.l.b16 %v1138
    %v1317 = vunpack.c.h.b16 %v1138
    %v1318 = vunpack.c.l.b16 %v1139
    %v1319 = vunpack.c.l.b16 %v1140
    %v1320 = vunpack.c.h.b16 %v1140
    %v1321 = vunpack.c.l.b16 %v1141
    %v1322 = vunpack.c.l.b16 %v1142
    %v1323 = vunpack.c.h.b16 %v1142
    %v1324 = vunpack.c.l.b16 %v1143
    %v1325 = vunpack.c.l.b16 %v1144
    %v1326 = vunpack.c.h.b16 %v1144
    %v1327 = vunpack.c.l.b16 %v1145
    %v1328 = vunpack.c.l.b16 %v1146
    %v1329 = vunpack.c.h.b16 %v1146
    %v1330 = vunpack.c.l.b16 %v1147
    %v1331 = vunpack.c.l.b16 %v1148
    %v1332 = vunpack.c.h.b16 %v1148
    %v1333 = vunpack.c.l.b16 %v1149
    %v1334 = vunpack.c.l.b16 %v1150
    %v1335 = vunpack.c.h.b16 %v1150
    %v1336 = vunpack.c.l.b16 %v1151
    %v1337 = vunpack.c.l.b16 %v1152
    %v1338 = vunpack.c.h.b16 %v1152
    %v1339 = vunpack.c.l.b16 %v1153
    %v1340 = vunpack.c.l.b16 %v1154
    %v1341 = vunpack.c.h.b16 %v1154
    %v1342 = vunpack.c.l.b16 %v1155
    %v1343 = vunpack.c.l.b16 %v1156
    %v1344 = vunpack.c.h.b16 %v1156
    %v1345 = vunpack.c.l.b16 %v1157
    %v1346 = vunpack.c.l.b16 %v1158
    %v1347 = vunpack.c.h.b16 %v1158
    %v1348 = vunpack.c.l.b16 %v1159
    %v1349 = vunpack.c.l.b16 %v1160
    %v1350 = vunpack.c.h.b16 %v1160
    %v1351 = vunpack.c.l.b16 %v1161
    %v1352 = vunpack.c.l.b16 %v1162
    %v1353 = vunpack.c.h.b16 %v1162
    %v1354 = vunpack.c.l.b16 %v1163
    %v1355 = vunpack.c.l.b16 %v1164
    %v1356 = vunpack.c.h.b16 %v1164
    %v1357 = vunpack.c.l.b16 %v1165
    %v1358 = vunpack.c.l.b16 %v1166
    %v1359 = vunpack.c.h.b16 %v1166
    %v1360 = vunpack.c.l.b16 %v1167
    %v1361 = vunpack.c.l.b16 %v1168
    %v1362 = vunpack.c.h.b16 %v1168
    %v1363 = vunpack.c.l.b16 %v1169
    %v1364 = vunpack.c.l.b16 %v1170
    %v1365 = vunpack.c.h.b16 %v1170
    %v1366 = vunpack.c.l.b16 %v1171
    %v1367 = vunpack.c.l.b16 %v1172
    %v1368 = vunpack.c.h.b16 %v1172
    %v1369 = vunpack.c.l.b16 %v1173
    %v1370 = vunpack.c.l.b16 %v1174
    %v1371 = vunpack.c.h.b16 %v1174
    %v1372 = vunpack.c.l.b16 %v1175
    %v1373 = vunpack.c.l.b16 %v1176
    %v1374 = vunpack.c.h.b16 %v1176
    %v1375 = vunpack.c.l.b16 %v1177
    %v1376 = vunpack.c.l.b16 %v1178
    %v1377 = vunpack.c.h.b16 %v1178
    %v1378 = vunpack.c.l.b16 %v1179
    %v1379 = vunpack.c.l.b16 %v1180
    %v1380 = vunpack.c.h.b16 %v1180
    %v1381 = vunpack.c.l.b16 %v1181
    %v1382 = vunpack.c.l.b16 %v1182
    %v1383 = vunpack.c.h.b16 %v1182
    %v1384 = vunpack.c.l.b16 %v1183
    %v1385 = vunpack.c.l.b16 %v1184
    %v1386 = vunpack.c.h.b16 %v1184
    %v1387 = vunpack.c.l.b16 %v1185
    %v1388 = vunpack.c.l.b16 %v1186
    %v1389 = vunpack.c.h.b16 %v1186
    %v1390 = vunpack.c.l.b16 %v1187
    %v1391 = vunpack.c.l.b16 %v1188
    %v1392 = vunpack.c.h.b16 %v1188
    %v1393 = vunpack.c.l.b16 %v1189
    %v1394 = vunpack.c.l.b16 %v1190
    %v1395 = vunpack.c.h.b16 %v1190
    %v1396 = vunpack.c.l.b16 %v1191
    %v1397 = vunpack.c.l.b16 %v1192
    %v1398 = vunpack.c.h.b16 %v1192
    %v1399 = vunpack.c.l.b16 %v1193
    %v1400 = vunpack.c.l.b16 %v1194
    %v1401 = vunpack.c.h.b16 %v1194
    %v1402 = vunpack.c.l.b16 %v1195
    %v1403 = vpack.c.b16 %v1292, %v1289
    %v1404 = vpack.c.b16 %v1293, %v1290
    %v1405 = vpack.c.b16 %v1294, %v1291
    %v1406 = vpack.c.b16 %v1298, %v1295
    %v1407 = vpack.c.b16 %v1299, %v1296
    %v1408 = vpack.c.b16 %v1300, %v1297
    %v1409 = vpack.c.b16 %v1304, %v1301
    %v1410 = vpack.c.b16 %v1305, %v1302
    %v1411 = vpack.c.b16 %v1306, %v1303
    %v1412 = vpack.c.b16 %v1310, %v1307
    %v1413 = vpack.c.b16 %v1311, %v1308
    %v1414 = vpack.c.b16 %v1312, %v1309
    %v1415 = vpack.c.b16 %v1316, %v1313
    %v1416 = vpack.c.b16 %v1317, %v1314
    %v1417 = vpack.c.b16 %v1318, %v1315
    %v1418 = vpack.c.b16 %v1322, %v1319
    %v1419 = vpack.c.b16 %v1323, %v1320
    %v1420 = vpack.c.b16 %v1324, %v1321
    %v1421 = vpack.c.b16 %v1328, %v1325
    %v1422 = vpack.c.b16 %v1329, %v1326
    %v1423 = vpack.c.b16 %v1330, %v1327
    %v1424 = vpack.c.b16 %v1334, %v1331
    %v1425 = vpack.c.b16 %v1335, %v1332
    %v1426 = vpack.c.b16 %v1336, %v1333
    %v1427 = vpack.c.b16 %v1340, %v1337
    %v1428 = vpack.c.b16 %v1341, %v1338
    %v1429 = vpack.c.b16 %v1342, %v1339
    %v1430 = vpack.c.b16 %v1346, %v1343
    %v1431 = vpack.c.b16 %v1347, %v1344
    %v1432 = vpack.c.b16 %v1348, %v1345
    %v1433 = vpack.c.b16 %v1352, %v1349
    %v1434 = vpack.c.b16 %v1353, %v1350
    %v1435 = vpack.c.b16 %v1354, %v1351
    %v1436 = vpack.c.b16 %v1358, %v1355
    %v1437 = vpack.c.b16 %v1359, %v1356
    %v1438 = vpack.c.b16 %v1360, %v1357
    %v1439 = vpack.c.b16 %v1364, %v1361
    %v1440 = vpack.c.b16 %v1365, %v1362
    %v1441 = vpack.c.b16 %v1366, %v1363
    %v1442 = vpack.c.b16 %v1370, %v1367
    %v1443 = vpack.c.b16 %v1371, %v1368
    %v1444 = vpack.c.b16 %v1372, %v1369
    %v1445 = vpack.c.b16 %v1376, %v1373
    %v1446 = vpack.c.b16 %v1377, %v1374
    %v1447 = vpack.c.b16 %v1378, %v1375
    %v1448 = vpack.c.b16 %v1382, %v1379
    %v1449 = vpack.c.b16 %v1383, %v1380
    %v1450 = vpack.c.b16 %v1384, %v1381
    %v1451 = vpack.c.b16 %v1388, %v1385
    %v1452 = vpack.c.b16 %v1389, %v1386
    %v1453 = vpack.c.b16 %v1390, %v1387
    %v1454 = vpack.c.b16 %v1394, %v1391
    %v1455 = vpack.c.b16 %v1395, %v1392
    %v1456 = vpack.c.b16 %v1396, %v1393
    %v1457 = vpack.c.b16 %v1400, %v1397
    %v1458 = vpack.c.b16 %v1401, %v1398
    %v1459 = vpack.c.b16 %v1402, %v1399
    %v1515 = vsel %vm817, %v1098, 0
    %v1518 = vsel %vm817, %v1101, 0
    %v1521 = vsel %vm817, %v1104, 0
    %v1524 = vsel %vm817, %v1107, 0
    %v1527 = vsel %vm817, %v1110, 0
    %v1530 = vsel %vm817, %v1113, 0
    %v1533 = vsel %vm817, %v1116, 0
    %v1536 = vsel %vm817, %v1119, 0
    %vm1538 = vcmask 1045504
    %v1540 = vsel %vm1538, %v1457, 0
    %v1543 = vsel %vm1538, %v1458, 0
    %v1546 = vsel %vm1538, %v1459, 0
    %1548 = vmatprep.subr.bf16.mxu0 %v1404
    %1549 = vmatpush1.bf16.msra.mxu0 %v1403
    %1550 = vmatprep.subr.bf16.mxu0 %v1407
    %1551 = vmatpush1.bf16.msra.mxu0 %v1406
    %1552 = vmatprep.subr.bf16.mxu0 %v1410
    %1553 = vmatpush1.bf16.msra.mxu0 %v1409
    %1554 = vmatprep.subr.bf16.mxu0 %v1413
    %1555 = vmatpush1.bf16.msra.mxu0 %v1412
    %1556 = vmatprep.subr.bf16.mxu0 %v1416
    %1557 = vmatpush1.bf16.msra.mxu0 %v1415
    %1558 = vmatprep.subr.bf16.mxu0 %v1419
    %1559 = vmatpush1.bf16.msra.mxu0 %v1418
    %1560 = vmatprep.subr.bf16.mxu0 %v1422
    %1561 = vmatpush1.bf16.msra.mxu0 %v1421
    %1562 = vmatprep.subr.bf16.mxu0 %v1425
    %1563 = vmatpush1.bf16.msra.mxu0 %v1424
    %1564 = vmatprep.subr.bf16.mxu0 %v1428
    %1565 = vmatpush1.bf16.msra.mxu0 %v1427
    %1566 = vmatprep.subr.bf16.mxu0 %v1431
    %1567 = vmatpush1.bf16.msra.mxu0 %v1430
    %1568 = vmatprep.subr.bf16.mxu0 %v1434
    %1569 = vmatpush1.bf16.msra.mxu0 %v1433
    %1570 = vmatprep.subr.bf16.mxu0 %v1437
    %1571 = vmatpush1.bf16.msra.mxu0 %v1436
    %1572 = vmatprep.subr.bf16.mxu0 %v1440
    %1573 = vmatpush1.bf16.msra.mxu0 %v1439
    %1574 = vmatprep.subr.bf16.mxu0 %v1443
    %1575 = vmatpush1.bf16.msra.mxu0 %v1442
    %1576 = vmatprep.subr.bf16.mxu0 %v1446
    %1577 = vmatpush1.bf16.msra.mxu0 %v1445
    %1578 = vmatprep.subr.bf16.mxu0 %v1449
    %1579 = vmatpush1.bf16.msra.mxu0 %v1448
    %1580 = vmatprep.mubr.bf16.mxu0 %v1097
    %1581 = vmatmul.mubr.bf16.gmra.mrb[0].mxu0 %v1096
    %v1582 = vpop.f32.mrb[0].mxu0
    %v1583 = vadd.f32 %v1201, %v1582
    %v1584 = vpop.f32.mrb[0].mxu0
    %v1585 = vadd.f32 %v1205, %v1584
    %v1586 = vpop.f32.mrb[0].mxu0
    %v1587 = vadd.f32 %v1201, %v1586
    %v1588 = vpop.f32.mrb[0].mxu0
    %v1589 = vadd.f32 %v1205, %v1588
    %1590 = vmatprep.mubr.bf16.mxu0 %v1100
    %1591 = vmatmul.mubr.bf16.gmra.mrb[0].mxu0 %v1099
    %v1592 = vpop.f32.mrb[0].mxu0
    %v1593 = vadd.f32 %v1201, %v1592
    %v1594 = vpop.f32.mrb[0].mxu0
    %v1595 = vadd.f32 %v1205, %v1594
    %v1596 = vpop.f32.mrb[0].mxu0
    %v1597 = vadd.f32 %v1201, %v1596
    %v1598 = vpop.f32.mrb[0].mxu0
    %v1599 = vadd.f32 %v1205, %v1598
    %1600 = vmatprep.mubr.bf16.mxu0 %v1103
    %1601 = vmatmul.mubr.bf16.gmra.mrb[0].mxu0 %v1102
    %v1602 = vpop.f32.mrb[0].mxu0
    %v1603 = vadd.f32 %v1201, %v1602
    %v1604 = vpop.f32.mrb[0].mxu0
    %v1605 = vadd.f32 %v1205, %v1604
    %v1606 = vpop.f32.mrb[0].mxu0
    %v1607 = vadd.f32 %v1201, %v1606
    %v1608 = vpop.f32.mrb[0].mxu0
    %v1609 = vadd.f32 %v1205, %v1608
    %1610 = vmatprep.mubr.bf16.mxu0 %v1106
    %1611 = vmatmul.mubr.bf16.gmra.mrb[0].mxu0 %v1105
    %v1612 = vpop.f32.mrb[0].mxu0
    %v1613 = vadd.f32 %v1201, %v1612
    %v1614 = vpop.f32.mrb[0].mxu0
    %v1615 = vadd.f32 %v1205, %v1614
    %v1616 = vpop.f32.mrb[0].mxu0
    %v1617 = vadd.f32 %v1201, %v1616
    %v1618 = vpop.f32.mrb[0].mxu0
    %v1619 = vadd.f32 %v1205, %v1618
    %1620 = vmatprep.mubr.bf16.mxu0 %v1109
    %1621 = vmatmul.mubr.bf16.gmra.mrb[0].mxu0 %v1108
    %v1622 = vpop.f32.mrb[0].mxu0
    %v1623 = vadd.f32 %v1201, %v1622
    %v1624 = vpop.f32.mrb[0].mxu0
    %v1625 = vadd.f32 %v1205, %v1624
    %v1626 = vpop.f32.mrb[0].mxu0
    %v1627 = vadd.f32 %v1201, %v1626
    %v1628 = vpop.f32.mrb[0].mxu0
    %v1629 = vadd.f32 %v1205, %v1628
    %1630 = vmatprep.mubr.bf16.mxu0 %v1112
    %1631 = vmatmul.mubr.bf16.gmra.mrb[0].mxu0 %v1111
    %v1632 = vpop.f32.mrb[0].mxu0
    %v1633 = vadd.f32 %v1201, %v1632
    %v1634 = vpop.f32.mrb[0].mxu0
    %v1635 = vadd.f32 %v1205, %v1634
    %v1636 = vpop.f32.mrb[0].mxu0
    %v1637 = vadd.f32 %v1201, %v1636
    %v1638 = vpop.f32.mrb[0].mxu0
    %v1639 = vadd.f32 %v1205, %v1638
    %1640 = vmatprep.mubr.bf16.mxu0 %v1115
    %1641 = vmatmul.mubr.bf16.gmra.mrb[0].mxu0 %v1114
    %v1642 = vpop.f32.mrb[0].mxu0
    %v1643 = vadd.f32 %v1201, %v1642
    %v1644 = vpop.f32.mrb[0].mxu0
    %v1645 = vadd.f32 %v1205, %v1644
    %v1646 = vpop.f32.mrb[0].mxu0
    %v1647 = vadd.f32 %v1201, %v1646
    %v1648 = vpop.f32.mrb[0].mxu0
    %v1649 = vadd.f32 %v1205, %v1648
    %1650 = vmatprep.mubr.bf16.mxu0 %v1118
    %1651 = vmatmul.mubr.bf16.gmra.mrb[0].mxu0 %v1117
    %v1652 = vpop.f32.mrb[0].mxu0
    %v1653 = vadd.f32 %v1201, %v1652
    %v1654 = vpop.f32.mrb[0].mxu0
    %v1655 = vadd.f32 %v1205, %v1654
    %v1656 = vpop.f32.mrb[0].mxu0
    %v1657 = vadd.f32 %v1201, %v1656
    %v1658 = vpop.f32.mrb[0].mxu0
    %v1659 = vadd.f32 %v1205, %v1658
    %1660 = vdwg.mxu0
    %1661 = vmatprep.subr.bf16.mxu0 %v1452
    %1662 = vmatpush1.bf16.msra.mxu0 %v1451
    %1663 = vmatprep.subr.bf16.mxu0 %v1455
    %1664 = vmatpush1.bf16.msra.mxu0 %v1454
    %1665 = vmatprep.subr.bf16.mxu0 %v1543
    %1666 = vmatpush1.bf16.msra.mxu0 %v1540
    %1667 = vmatprep.subr.bf16.mxu0 0
    %1668 = vmatpush1.bf16.msra.mxu0 0
    %1669 = vmatprep.subr.bf16.mxu0 0
    %1670 = vmatpush1.bf16.msra.mxu0 0
    %1671 = vmatprep.subr.bf16.mxu0 0
    %1672 = vmatpush1.bf16.msra.mxu0 0
    %1673 = vmatprep.subr.bf16.mxu0 0
    %1674 = vmatpush1.bf16.msra.mxu0 0
    %1675 = vmatprep.subr.bf16.mxu0 0
    %1676 = vmatpush1.bf16.msra.mxu0 0
    %1677 = vmatprep.subr.bf16.mxu0 0
    %1678 = vmatpush1.bf16.msra.mxu0 0
    %1679 = vmatprep.subr.bf16.mxu0 0
    %1680 = vmatpush1.bf16.msra.mxu0 0
    %1681 = vmatprep.subr.bf16.mxu0 0
    %1682 = vmatpush1.bf16.msra.mxu0 0
    %1683 = vmatprep.subr.bf16.mxu0 0
    %1684 = vmatpush1.bf16.msra.mxu0 0
    %1685 = vmatprep.subr.bf16.mxu0 0
    %1686 = vmatpush1.bf16.msra.mxu0 0
    %1687 = vmatprep.subr.bf16.mxu0 0
    %1688 = vmatpush1.bf16.msra.mxu0 0
    %1689 = vmatprep.subr.bf16.mxu0 0
    %1690 = vmatpush1.bf16.msra.mxu0 0
    %1691 = vmatprep.subr.bf16.mxu0 0
    %1692 = vmatpush1.bf16.msra.mxu0 0
    %1693 = vmatprep.mubr.bf16.mxu0 0
    %1694 = vmatmul.mubr.bf16.gmra.mrb[0].mxu0 %v1515
    %v1695 = vpop.f32.mrb[0].mxu0
    %v1696 = vadd.f32 %v1583, %v1695
    %v1697 = vpop.f32.mrb[0].mxu0
    %v1698 = vadd.f32 %v1585, %v1697
    %v1699 = vpop.f32.mrb[0].mxu0
    %v1700 = vadd.f32 %v1587, %v1699
    %v1701 = vpop.f32.mrb[0].mxu0
    %v1702 = vadd.f32 %v1589, %v1701
    %1703 = vmatprep.mubr.bf16.mxu0 0
    %1704 = vmatmul.mubr.bf16.gmra.mrb[0].mxu0 %v1518
    %v1705 = vpop.f32.mrb[0].mxu0
    %v1706 = vadd.f32 %v1593, %v1705
    %v1707 = vpop.f32.mrb[0].mxu0
    %v1708 = vadd.f32 %v1595, %v1707
    %v1709 = vpop.f32.mrb[0].mxu0
    %v1710 = vadd.f32 %v1597, %v1709
    %v1711 = vpop.f32.mrb[0].mxu0
    %v1712 = vadd.f32 %v1599, %v1711
    %1713 = vmatprep.mubr.bf16.mxu0 0
    %1714 = vmatmul.mubr.bf16.gmra.mrb[0].mxu0 %v1521
    %v1715 = vpop.f32.mrb[0].mxu0
    %v1716 = vadd.f32 %v1603, %v1715
    %v1717 = vpop.f32.mrb[0].mxu0
    %v1718 = vadd.f32 %v1605, %v1717
    %v1719 = vpop.f32.mrb[0].mxu0
    %v1720 = vadd.f32 %v1607, %v1719
    %v1721 = vpop.f32.mrb[0].mxu0
    %v1722 = vadd.f32 %v1609, %v1721
    %1723 = vmatprep.mubr.bf16.mxu0 0
    %1724 = vmatmul.mubr.bf16.gmra.mrb[0].mxu0 %v1524
    %v1725 = vpop.f32.mrb[0].mxu0
    %v1726 = vadd.f32 %v1613, %v1725
    %v1727 = vpop.f32.mrb[0].mxu0
    %v1728 = vadd.f32 %v1615, %v1727
    %v1729 = vpop.f32.mrb[0].mxu0
    %v1730 = vadd.f32 %v1617, %v1729
    %v1731 = vpop.f32.mrb[0].mxu0
    %v1732 = vadd.f32 %v1619, %v1731
    %1733 = vmatprep.mubr.bf16.mxu0 0
    %1734 = vmatmul.mubr.bf16.gmra.mrb[0].mxu0 %v1527
    %v1735 = vpop.f32.mrb[0].mxu0
    %v1736 = vadd.f32 %v1623, %v1735
    %v1737 = vpop.f32.mrb[0].mxu0
    %v1738 = vadd.f32 %v1625, %v1737
    %v1739 = vpop.f32.mrb[0].mxu0
    %v1740 = vadd.f32 %v1627, %v1739
    %v1741 = vpop.f32.mrb[0].mxu0
    %v1742 = vadd.f32 %v1629, %v1741
    %1743 = vmatprep.mubr.bf16.mxu0 0
    %1744 = vmatmul.mubr.bf16.gmra.mrb[0].mxu0 %v1530
    %v1745 = vpop.f32.mrb[0].mxu0
    %v1746 = vadd.f32 %v1633, %v1745
    %v1747 = vpop.f32.mrb[0].mxu0
    %v1748 = vadd.f32 %v1635, %v1747
    %v1749 = vpop.f32.mrb[0].mxu0
    %v1750 = vadd.f32 %v1637, %v1749
    %v1751 = vpop.f32.mrb[0].mxu0
    %v1752 = vadd.f32 %v1639, %v1751
    %1753 = vmatprep.mubr.bf16.mxu0 0
    %1754 = vmatmul.mubr.bf16.gmra.mrb[0].mxu0 %v1533
    %v1755 = vpop.f32.mrb[0].mxu0
    %v1756 = vadd.f32 %v1643, %v1755
    %v1757 = vpop.f32.mrb[0].mxu0
    %v1758 = vadd.f32 %v1645, %v1757
    %v1759 = vpop.f32.mrb[0].mxu0
    %v1760 = vadd.f32 %v1647, %v1759
    %v1761 = vpop.f32.mrb[0].mxu0
    %v1762 = vadd.f32 %v1649, %v1761
    %1763 = vmatprep.mubr.bf16.mxu0 0
    %1764 = vmatmul.mubr.bf16.gmra.mrb[0].mxu0 %v1536
    %v1765 = vpop.f32.mrb[0].mxu0
    %v1766 = vadd.f32 %v1653, %v1765
    %v1767 = vpop.f32.mrb[0].mxu0
    %v1768 = vadd.f32 %v1655, %v1767
    %v1769 = vpop.f32.mrb[0].mxu0
    %v1770 = vadd.f32 %v1657, %v1769
    %v1771 = vpop.f32.mrb[0].mxu0
    %v1772 = vadd.f32 %v1659, %v1771
    %1773 = vdwg.mxu0
    %1774 = vmatprep.subr.bf16.mxu0 0
    %1775 = vmatpush1.bf16.msra.mxu0 %v1405
    %1776 = vmatprep.subr.bf16.mxu0 0
    %1777 = vmatpush1.bf16.msra.mxu0 %v1408
    %1778 = vmatprep.subr.bf16.mxu0 0
    %1779 = vmatpush1.bf16.msra.mxu0 %v1411
    %1780 = vmatprep.subr.bf16.mxu0 0
    %1781 = vmatpush1.bf16.msra.mxu0 %v1414
    %1782 = vmatprep.subr.bf16.mxu0 0
    %1783 = vmatpush1.bf16.msra.mxu0 %v1417
    %1784 = vmatprep.subr.bf16.mxu0 0
    %1785 = vmatpush1.bf16.msra.mxu0 %v1420
    %1786 = vmatprep.subr.bf16.mxu0 0
    %1787 = vmatpush1.bf16.msra.mxu0 %v1423
    %1788 = vmatprep.subr.bf16.mxu0 0
    %1789 = vmatpush1.bf16.msra.mxu0 %v1426
    %1790 = vmatprep.subr.bf16.mxu0 0
    %1791 = vmatpush1.bf16.msra.mxu0 %v1429
    %1792 = vmatprep.subr.bf16.mxu0 0
    %1793 = vmatpush1.bf16.msra.mxu0 %v1432
    %1794 = vmatprep.subr.bf16.mxu0 0
    %1795 = vmatpush1.bf16.msra.mxu0 %v1435
    %1796 = vmatprep.subr.bf16.mxu0 0
    %1797 = vmatpush1.bf16.msra.mxu0 %v1438
    %1798 = vmatprep.subr.bf16.mxu0 0
    %1799 = vmatpush1.bf16.msra.mxu0 %v1441
    %1800 = vmatprep.subr.bf16.mxu0 0
    %1801 = vmatpush1.bf16.msra.mxu0 %v1444
    %1802 = vmatprep.subr.bf16.mxu0 0
    %1803 = vmatpush1.bf16.msra.mxu0 %v1447
    %1804 = vmatprep.subr.bf16.mxu0 0
    %1805 = vmatpush1.bf16.msra.mxu0 %v1450
    %1806 = vmatprep.mubr.bf16.mxu0 %v1097
    %1807 = vmatmul.mubr.bf16.gmra.mrb[0].mxu0 %v1096
    %v1808 = vpop.f32.mrb[0].mxu0
    %v1809 = vadd.f32 %v1209, %v1808
    %v1810 = vpop.f32.mrb[0].mxu0
    %v1811 = vpop.f32.mrb[0].mxu0
    %v1812 = vadd.f32 %v1209, %v1811
    %v1813 = vpop.f32.mrb[0].mxu0
    %1814 = vmatprep.mubr.bf16.mxu0 %v1100
    %1815 = vmatmul.mubr.bf16.gmra.mrb[0].mxu0 %v1099
    %v1816 = vpop.f32.mrb[0].mxu0
    %v1817 = vadd.f32 %v1209, %v1816
    %v1818 = vpop.f32.mrb[0].mxu0
    %v1819 = vpop.f32.mrb[0].mxu0
    %v1820 = vadd.f32 %v1209, %v1819
    %v1821 = vpop.f32.mrb[0].mxu0
    %1822 = vmatprep.mubr.bf16.mxu0 %v1103
    %1823 = vmatmul.mubr.bf16.gmra.mrb[0].mxu0 %v1102
    %v1824 = vpop.f32.mrb[0].mxu0
    %v1825 = vadd.f32 %v1209, %v1824
    %v1826 = vpop.f32.mrb[0].mxu0
    %v1827 = vpop.f32.mrb[0].mxu0
    %v1828 = vadd.f32 %v1209, %v1827
    %v1829 = vpop.f32.mrb[0].mxu0
    %1830 = vmatprep.mubr.bf16.mxu0 %v1106
    %1831 = vmatmul.mubr.bf16.gmra.mrb[0].mxu0 %v1105
    %v1832 = vpop.f32.mrb[0].mxu0
    %v1833 = vadd.f32 %v1209, %v1832
    %v1834 = vpop.f32.mrb[0].mxu0
    %v1835 = vpop.f32.mrb[0].mxu0
    %v1836 = vadd.f32 %v1209, %v1835
    %v1837 = vpop.f32.mrb[0].mxu0
    %1838 = vmatprep.mubr.bf16.mxu0 %v1109
    %1839 = vmatmul.mubr.bf16.gmra.mrb[0].mxu0 %v1108
    %v1840 = vpop.f32.mrb[0].mxu0
    %v1841 = vadd.f32 %v1209, %v1840
    %v1842 = vpop.f32.mrb[0].mxu0
    %v1843 = vpop.f32.mrb[0].mxu0
    %v1844 = vadd.f32 %v1209, %v1843
    %v1845 = vpop.f32.mrb[0].mxu0
    %1846 = vmatprep.mubr.bf16.mxu0 %v1112
    %1847 = vmatmul.mubr.bf16.gmra.mrb[0].mxu0 %v1111
    %v1848 = vpop.f32.mrb[0].mxu0
    %v1849 = vadd.f32 %v1209, %v1848
    %v1850 = vpop.f32.mrb[0].mxu0
    %v1851 = vpop.f32.mrb[0].mxu0
    %v1852 = vadd.f32 %v1209, %v1851
    %v1853 = vpop.f32.mrb[0].mxu0
    %1854 = vmatprep.mubr.bf16.mxu0 %v1115
    %1855 = vmatmul.mubr.bf16.gmra.mrb[0].mxu0 %v1114
    %v1856 = vpop.f32.mrb[0].mxu0
    %v1857 = vadd.f32 %v1209, %v1856
    %v1858 = vpop.f32.mrb[0].mxu0
    %v1859 = vpop.f32.mrb[0].mxu0
    %v1860 = vadd.f32 %v1209, %v1859
    %v1861 = vpop.f32.mrb[0].mxu0
    %1862 = vmatprep.mubr.bf16.mxu0 %v1118
    %1863 = vmatmul.mubr.bf16.gmra.mrb[0].mxu0 %v1117
    %v1864 = vpop.f32.mrb[0].mxu0
    %v1865 = vadd.f32 %v1209, %v1864
    %v1866 = vpop.f32.mrb[0].mxu0
    %v1867 = vpop.f32.mrb[0].mxu0
    %v1868 = vadd.f32 %v1209, %v1867
    %v1869 = vpop.f32.mrb[0].mxu0
    %1870 = vdwg.mxu0
    %1871 = vmatprep.subr.bf16.mxu0 0
    %1872 = vmatpush1.bf16.msra.mxu0 %v1453
    %1873 = vmatprep.subr.bf16.mxu0 0
    %1874 = vmatpush1.bf16.msra.mxu0 %v1456
    %1875 = vmatprep.subr.bf16.mxu0 0
    %1876 = vmatpush1.bf16.msra.mxu0 %v1546
    %1877 = vmatprep.subr.bf16.mxu0 0
    %1878 = vmatpush1.bf16.msra.mxu0 0
    %1879 = vmatprep.subr.bf16.mxu0 0
    %1880 = vmatpush1.bf16.msra.mxu0 0
    %1881 = vmatprep.subr.bf16.mxu0 0
    %1882 = vmatpush1.bf16.msra.mxu0 0
    %1883 = vmatprep.subr.bf16.mxu0 0
    %1884 = vmatpush1.bf16.msra.mxu0 0
    %1885 = vmatprep.subr.bf16.mxu0 0
    %1886 = vmatpush1.bf16.msra.mxu0 0
    %1887 = vmatprep.subr.bf16.mxu0 0
    %1888 = vmatpush1.bf16.msra.mxu0 0
    %1889 = vmatprep.subr.bf16.mxu0 0
    %1890 = vmatpush1.bf16.msra.mxu0 0
    %1891 = vmatprep.subr.bf16.mxu0 0
    %1892 = vmatpush1.bf16.msra.mxu0 0
    %1893 = vmatprep.subr.bf16.mxu0 0
    %1894 = vmatpush1.bf16.msra.mxu0 0
    %1895 = vmatprep.subr.bf16.mxu0 0
    %1896 = vmatpush1.bf16.msra.mxu0 0
    %1897 = vmatprep.subr.bf16.mxu0 0
    %1898 = vmatpush1.bf16.msra.mxu0 0
    %1899 = vmatprep.subr.bf16.mxu0 0
    %1900 = vmatpush1.bf16.msra.mxu0 0
    %1901 = vmatprep.subr.bf16.mxu0 0
    %1902 = vmatpush1.bf16.msra.mxu0 0
    %1903 = vmatprep.mubr.bf16.mxu0 0
    %1904 = vmatmul.mubr.bf16.gmra.mrb[0].mxu0 %v1515
    %v1905 = vpop.f32.mrb[0].mxu0
    %v1906 = vadd.f32 %v1809, %v1905
    %v1907 = vpop.f32.mrb[0].mxu0
    %v1908 = vpop.f32.mrb[0].mxu0
    %v1909 = vadd.f32 %v1812, %v1908
    %v1910 = vpop.f32.mrb[0].mxu0
    %1911 = vmatprep.mubr.bf16.mxu0 0
    %1912 = vmatmul.mubr.bf16.gmra.mrb[0].mxu0 %v1518
    %v1913 = vpop.f32.mrb[0].mxu0
    %v1914 = vadd.f32 %v1817, %v1913
    %v1915 = vpop.f32.mrb[0].mxu0
    %v1916 = vpop.f32.mrb[0].mxu0
    %v1917 = vadd.f32 %v1820, %v1916
    %v1918 = vpop.f32.mrb[0].mxu0
    %1919 = vmatprep.mubr.bf16.mxu0 0
    %1920 = vmatmul.mubr.bf16.gmra.mrb[0].mxu0 %v1521
    %v1921 = vpop.f32.mrb[0].mxu0
    %v1922 = vadd.f32 %v1825, %v1921
    %v1923 = vpop.f32.mrb[0].mxu0
    %v1924 = vpop.f32.mrb[0].mxu0
    %v1925 = vadd.f32 %v1828, %v1924
    %v1926 = vpop.f32.mrb[0].mxu0
    %1927 = vmatprep.mubr.bf16.mxu0 0
    %1928 = vmatmul.mubr.bf16.gmra.mrb[0].mxu0 %v1524
    %v1929 = vpop.f32.mrb[0].mxu0
    %v1930 = vadd.f32 %v1833, %v1929
    %v1931 = vpop.f32.mrb[0].mxu0
    %v1932 = vpop.f32.mrb[0].mxu0
    %v1933 = vadd.f32 %v1836, %v1932
    %v1934 = vpop.f32.mrb[0].mxu0
    %1935 = vmatprep.mubr.bf16.mxu0 0
    %1936 = vmatmul.mubr.bf16.gmra.mrb[0].mxu0 %v1527
    %v1937 = vpop.f32.mrb[0].mxu0
    %v1938 = vadd.f32 %v1841, %v1937
    %v1939 = vpop.f32.mrb[0].mxu0
    %v1940 = vpop.f32.mrb[0].mxu0
    %v1941 = vadd.f32 %v1844, %v1940
    %v1942 = vpop.f32.mrb[0].mxu0
    %1943 = vmatprep.mubr.bf16.mxu0 0
    %1944 = vmatmul.mubr.bf16.gmra.mrb[0].mxu0 %v1530
    %v1945 = vpop.f32.mrb[0].mxu0
    %v1946 = vadd.f32 %v1849, %v1945
    %v1947 = vpop.f32.mrb[0].mxu0
    %v1948 = vpop.f32.mrb[0].mxu0
    %v1949 = vadd.f32 %v1852, %v1948
    %v1950 = vpop.f32.mrb[0].mxu0
    %1951 = vmatprep.mubr.bf16.mxu0 0
    %1952 = vmatmul.mubr.bf16.gmra.mrb[0].mxu0 %v1533
    %v1953 = vpop.f32.mrb[0].mxu0
    %v1954 = vadd.f32 %v1857, %v1953
    %v1955 = vpop.f32.mrb[0].mxu0
    %v1956 = vpop.f32.mrb[0].mxu0
    %v1957 = vadd.f32 %v1860, %v1956
    %v1958 = vpop.f32.mrb[0].mxu0
    %1959 = vmatprep.mubr.bf16.mxu0 0
    %1960 = vmatmul.mubr.bf16.gmra.mrb[0].mxu0 %v1536
    %v1961 = vpop.f32.mrb[0].mxu0
    %v1962 = vadd.f32 %v1865, %v1961
    %v1963 = vpop.f32.mrb[0].mxu0
    %v1964 = vpop.f32.mrb[0].mxu0
    %v1965 = vadd.f32 %v1868, %v1964
    %v1966 = vpop.f32.mrb[0].mxu0
    %1967 = vdwg.mxu0
    %vm1968 = vcmp.gt.f32.partialorder %v1696, 0.0
    %vm1969 = vcmp.gt.f32.partialorder %v1698, 0.0
    %vm1970 = vcmp.gt.f32.partialorder %v1906, 0.0
    %vm1971 = vcmp.gt.f32.partialorder %v1700, 0.0
    %vm1972 = vcmp.gt.f32.partialorder %v1702, 0.0
    %vm1973 = vcmp.gt.f32.partialorder %v1909, 0.0
    %vm1974 = vcmp.gt.f32.partialorder %v1706, 0.0
    %vm1975 = vcmp.gt.f32.partialorder %v1708, 0.0
    %vm1976 = vcmp.gt.f32.partialorder %v1914, 0.0
    %vm1977 = vcmp.gt.f32.partialorder %v1710, 0.0
    %vm1978 = vcmp.gt.f32.partialorder %v1712, 0.0
    %vm1979 = vcmp.gt.f32.partialorder %v1917, 0.0
    %vm1980 = vcmp.gt.f32.partialorder %v1716, 0.0
    %vm1981 = vcmp.gt.f32.partialorder %v1718, 0.0
    %vm1982 = vcmp.gt.f32.partialorder %v1922, 0.0
    %vm1983 = vcmp.gt.f32.partialorder %v1720, 0.0
    %vm1984 = vcmp.gt.f32.partialorder %v1722, 0.0
    %vm1985 = vcmp.gt.f32.partialorder %v1925, 0.0
    %vm1986 = vcmp.gt.f32.partialorder %v1726, 0.0
    %vm1987 = vcmp.gt.f32.partialorder %v1728, 0.0
    %vm1988 = vcmp.gt.f32.partialorder %v1930, 0.0
    %vm1989 = vcmp.gt.f32.partialorder %v1730, 0.0
    %vm1990 = vcmp.gt.f32.partialorder %v1732, 0.0
    %vm1991 = vcmp.gt.f32.partialorder %v1933, 0.0
    %vm1992 = vcmp.gt.f32.partialorder %v1736, 0.0
    %vm1993 = vcmp.gt.f32.partialorder %v1738, 0.0
    %vm1994 = vcmp.gt.f32.partialorder %v1938, 0.0
    %vm1995 = vcmp.gt.f32.partialorder %v1740, 0.0
    %vm1996 = vcmp.gt.f32.partialorder %v1742, 0.0
    %vm1997 = vcmp.gt.f32.partialorder %v1941, 0.0
    %vm1998 = vcmp.gt.f32.partialorder %v1746, 0.0
    %vm1999 = vcmp.gt.f32.partialorder %v1748, 0.0
    %vm2000 = vcmp.gt.f32.partialorder %v1946, 0.0
    %vm2001 = vcmp.gt.f32.partialorder %v1750, 0.0
    %vm2002 = vcmp.gt.f32.partialorder %v1752, 0.0
    %vm2003 = vcmp.gt.f32.partialorder %v1949, 0.0
    %vm2004 = vcmp.gt.f32.partialorder %v1756, 0.0
    %vm2005 = vcmp.gt.f32.partialorder %v1758, 0.0
    %vm2006 = vcmp.gt.f32.partialorder %v1954, 0.0
    %vm2007 = vcmp.gt.f32.partialorder %v1760, 0.0
    %vm2008 = vcmp.gt.f32.partialorder %v1762, 0.0
    %vm2009 = vcmp.gt.f32.partialorder %v1957, 0.0
    %vm2010 = vcmp.gt.f32.partialorder %v1766, 0.0
    %vm2011 = vcmp.gt.f32.partialorder %v1768, 0.0
    %vm2012 = vcmp.gt.f32.partialorder %v1962, 0.0
    %vm2013 = vcmp.gt.f32.partialorder %v1770, 0.0
    %vm2014 = vcmp.gt.f32.partialorder %v1772, 0.0
    %vm2015 = vcmp.gt.f32.partialorder %v1965, 0.0
    %v2016 = vmin.f32 %v1696, 0.0
    %v2017 = vmin.f32 %v1698, 0.0
    %v2018 = vmin.f32 %v1906, 0.0
    %v2019 = vmin.f32 %v1700, 0.0
    %v2020 = vmin.f32 %v1702, 0.0
    %v2021 = vmin.f32 %v1909, 0.0
    %v2022 = vmin.f32 %v1706, 0.0
    %v2023 = vmin.f32 %v1708, 0.0
    %v2024 = vmin.f32 %v1914, 0.0
    %v2025 = vmin.f32 %v1710, 0.0
    %v2026 = vmin.f32 %v1712, 0.0
    %v2027 = vmin.f32 %v1917, 0.0
    %v2028 = vmin.f32 %v1716, 0.0
    %v2029 = vmin.f32 %v1718, 0.0
    %v2030 = vmin.f32 %v1922, 0.0
    %v2031 = vmin.f32 %v1720, 0.0
    %v2032 = vmin.f32 %v1722, 0.0
    %v2033 = vmin.f32 %v1925, 0.0
    %v2034 = vmin.f32 %v1726, 0.0
    %v2035 = vmin.f32 %v1728, 0.0
    %v2036 = vmin.f32 %v1930, 0.0
    %v2037 = vmin.f32 %v1730, 0.0
    %v2038 = vmin.f32 %v1732, 0.0
    %v2039 = vmin.f32 %v1933, 0.0
    %v2040 = vmin.f32 %v1736, 0.0
    %v2041 = vmin.f32 %v1738, 0.0
    %v2042 = vmin.f32 %v1938, 0.0
    %v2043 = vmin.f32 %v1740, 0.0
    %v2044 = vmin.f32 %v1742, 0.0
    %v2045 = vmin.f32 %v1941, 0.0
    %v2046 = vmin.f32 %v1746, 0.0
    %v2047 = vmin.f32 %v1748, 0.0
    %v2048 = vmin.f32 %v1946, 0.0
    %v2049 = vmin.f32 %v1750, 0.0
    %v2050 = vmin.f32 %v1752, 0.0
    %v2051 = vmin.f32 %v1949, 0.0
    %v2052 = vmin.f32 %v1756, 0.0
    %v2053 = vmin.f32 %v1758, 0.0
    %v2054 = vmin.f32 %v1954, 0.0
    %v2055 = vmin.f32 %v1760, 0.0
    %v2056 = vmin.f32 %v1762, 0.0
    %v2057 = vmin.f32 %v1957, 0.0
    %v2058 = vmin.f32 %v1766, 0.0
    %v2059 = vmin.f32 %v1768, 0.0
    %v2060 = vmin.f32 %v1962, 0.0
    %v2061 = vmin.f32 %v1770, 0.0
    %v2062 = vmin.f32 %v1772, 0.0
    %v2063 = vmin.f32 %v1965, 0.0
    %v2064 = vmul.f32 %v2016, 1.442695
    %v2065 = vpow.pop %v2064
    %v2066 = vmul.f32 %v2017, 1.442695
    %v2067 = vpow.pop %v2066
    %v2068 = vmul.f32 %v2018, 1.442695
    %v2069 = vpow.pop %v2068
    %v2070 = vmul.f32 %v2019, 1.442695
    %v2071 = vpow.pop %v2070
    %v2072 = vmul.f32 %v2020, 1.442695
    %v2073 = vpow.pop %v2072
    %v2074 = vmul.f32 %v2021, 1.442695
    %v2075 = vpow.pop %v2074
    %v2076 = vmul.f32 %v2022, 1.442695
    %v2077 = vpow.pop %v2076
    %v2078 = vmul.f32 %v2023, 1.442695
    %v2079 = vpow.pop %v2078
    %v2080 = vmul.f32 %v2024, 1.442695
    %v2081 = vpow.pop %v2080
    %v2082 = vmul.f32 %v2025, 1.442695
    %v2083 = vpow.pop %v2082
    %v2084 = vmul.f32 %v2026, 1.442695
    %v2085 = vpow.pop %v2084
    %v2086 = vmul.f32 %v2027, 1.442695
    %v2087 = vpow.pop %v2086
    %v2088 = vmul.f32 %v2028, 1.442695
    %v2089 = vpow.pop %v2088
    %v2090 = vmul.f32 %v2029, 1.442695
    %v2091 = vpow.pop %v2090
    %v2092 = vmul.f32 %v2030, 1.442695
    %v2093 = vpow.pop %v2092
    %v2094 = vmul.f32 %v2031, 1.442695
    %v2095 = vpow.pop %v2094
    %v2096 = vmul.f32 %v2032, 1.442695
    %v2097 = vpow.pop %v2096
    %v2098 = vmul.f32 %v2033, 1.442695
    %v2099 = vpow.pop %v2098
    %v2100 = vmul.f32 %v2034, 1.442695
    %v2101 = vpow.pop %v2100
    %v2102 = vmul.f32 %v2035, 1.442695
    %v2103 = vpow.pop %v2102
    %v2104 = vmul.f32 %v2036, 1.442695
    %v2105 = vpow.pop %v2104
    %v2106 = vmul.f32 %v2037, 1.442695
    %v2107 = vpow.pop %v2106
    %v2108 = vmul.f32 %v2038, 1.442695
    %v2109 = vpow.pop %v2108
    %v2110 = vmul.f32 %v2039, 1.442695
    %v2111 = vpow.pop %v2110
    %v2112 = vmul.f32 %v2040, 1.442695
    %v2113 = vpow.pop %v2112
    %v2114 = vmul.f32 %v2041, 1.442695
    %v2115 = vpow.pop %v2114
    %v2116 = vmul.f32 %v2042, 1.442695
    %v2117 = vpow.pop %v2116
    %v2118 = vmul.f32 %v2043, 1.442695
    %v2119 = vpow.pop %v2118
    %v2120 = vmul.f32 %v2044, 1.442695
    %v2121 = vpow.pop %v2120
    %v2122 = vmul.f32 %v2045, 1.442695
    %v2123 = vpow.pop %v2122
    %v2124 = vmul.f32 %v2046, 1.442695
    %v2125 = vpow.pop %v2124
    %v2126 = vmul.f32 %v2047, 1.442695
    %v2127 = vpow.pop %v2126
    %v2128 = vmul.f32 %v2048, 1.442695
    %v2129 = vpow.pop %v2128
    %v2130 = vmul.f32 %v2049, 1.442695
    %v2131 = vpow.pop %v2130
    %v2132 = vmul.f32 %v2050, 1.442695
    %v2133 = vpow.pop %v2132
    %v2134 = vmul.f32 %v2051, 1.442695
    %v2135 = vpow.pop %v2134
    %v2136 = vmul.f32 %v2052, 1.442695
    %v2137 = vpow.pop %v2136
    %v2138 = vmul.f32 %v2053, 1.442695
    %v2139 = vpow.pop %v2138
    %v2140 = vmul.f32 %v2054, 1.442695
    %v2141 = vpow.pop %v2140
    %v2142 = vmul.f32 %v2055, 1.442695
    %v2143 = vpow.pop %v2142
    %v2144 = vmul.f32 %v2056, 1.442695
    %v2145 = vpow.pop %v2144
    %v2146 = vmul.f32 %v2057, 1.442695
    %v2147 = vpow.pop %v2146
    %v2148 = vmul.f32 %v2058, 1.442695
    %v2149 = vpow.pop %v2148
    %v2150 = vmul.f32 %v2059, 1.442695
    %v2151 = vpow.pop %v2150
    %v2152 = vmul.f32 %v2060, 1.442695
    %v2153 = vpow.pop %v2152
    %v2154 = vmul.f32 %v2061, 1.442695
    %v2155 = vpow.pop %v2154
    %v2156 = vmul.f32 %v2062, 1.442695
    %v2157 = vpow.pop %v2156
    %v2158 = vmul.f32 %v2063, 1.442695
    %v2159 = vpow.pop %v2158
    %v2160 = vsub.f32 %v2065, 1.0
    %v2161 = vsub.f32 %v2067, 1.0
    %v2162 = vsub.f32 %v2069, 1.0
    %v2163 = vsub.f32 %v2071, 1.0
    %v2164 = vsub.f32 %v2073, 1.0
    %v2165 = vsub.f32 %v2075, 1.0
    %v2166 = vsub.f32 %v2077, 1.0
    %v2167 = vsub.f32 %v2079, 1.0
    %v2168 = vsub.f32 %v2081, 1.0
    %v2169 = vsub.f32 %v2083, 1.0
    %v2170 = vsub.f32 %v2085, 1.0
    %v2171 = vsub.f32 %v2087, 1.0
    %v2172 = vsub.f32 %v2089, 1.0
    %v2173 = vsub.f32 %v2091, 1.0
    %v2174 = vsub.f32 %v2093, 1.0
    %v2175 = vsub.f32 %v2095, 1.0
    %v2176 = vsub.f32 %v2097, 1.0
    %v2177 = vsub.f32 %v2099, 1.0
    %v2178 = vsub.f32 %v2101, 1.0
    %v2179 = vsub.f32 %v2103, 1.0
    %v2180 = vsub.f32 %v2105, 1.0
    %v2181 = vsub.f32 %v2107, 1.0
    %v2182 = vsub.f32 %v2109, 1.0
    %v2183 = vsub.f32 %v2111, 1.0
    %v2184 = vsub.f32 %v2113, 1.0
    %v2185 = vsub.f32 %v2115, 1.0
    %v2186 = vsub.f32 %v2117, 1.0
    %v2187 = vsub.f32 %v2119, 1.0
    %v2188 = vsub.f32 %v2121, 1.0
    %v2189 = vsub.f32 %v2123, 1.0
    %v2190 = vsub.f32 %v2125, 1.0
    %v2191 = vsub.f32 %v2127, 1.0
    %v2192 = vsub.f32 %v2129, 1.0
    %v2193 = vsub.f32 %v2131, 1.0
    %v2194 = vsub.f32 %v2133, 1.0
    %v2195 = vsub.f32 %v2135, 1.0
    %v2196 = vsub.f32 %v2137, 1.0
    %v2197 = vsub.f32 %v2139, 1.0
    %v2198 = vsub.f32 %v2141, 1.0
    %v2199 = vsub.f32 %v2143, 1.0
    %v2200 = vsub.f32 %v2145, 1.0
    %v2201 = vsub.f32 %v2147, 1.0
    %v2202 = vsub.f32 %v2149, 1.0
    %v2203 = vsub.f32 %v2151, 1.0
    %v2204 = vsub.f32 %v2153, 1.0
    %v2205 = vsub.f32 %v2155, 1.0
    %v2206 = vsub.f32 %v2157, 1.0
    %v2207 = vsub.f32 %v2159, 1.0
    %v2208 = vsel %vm1968, %v1696, %v2160
    %v2209 = vsel %vm1969, %v1698, %v2161
    %v2210 = vsel %vm1970, %v1906, %v2162
    %v2211 = vsel %vm1971, %v1700, %v2163
    %v2212 = vsel %vm1972, %v1702, %v2164
    %v2213 = vsel %vm1973, %v1909, %v2165
    %v2214 = vsel %vm1974, %v1706, %v2166
    %v2215 = vsel %vm1975, %v1708, %v2167
    %v2216 = vsel %vm1976, %v1914, %v2168
    %v2217 = vsel %vm1977, %v1710, %v2169
    %v2218 = vsel %vm1978, %v1712, %v2170
    %v2219 = vsel %vm1979, %v1917, %v2171
    %v2220 = vsel %vm1980, %v1716, %v2172
    %v2221 = vsel %vm1981, %v1718, %v2173
    %v2222 = vsel %vm1982, %v1922, %v2174
    %v2223 = vsel %vm1983, %v1720, %v2175
    %v2224 = vsel %vm1984, %v1722, %v2176
    %v2225 = vsel %vm1985, %v1925, %v2177
    %v2226 = vsel %vm1986, %v1726, %v2178
    %v2227 = vsel %vm1987, %v1728, %v2179
    %v2228 = vsel %vm1988, %v1930, %v2180
    %v2229 = vsel %vm1989, %v1730, %v2181
    %v2230 = vsel %vm1990, %v1732, %v2182
    %v2231 = vsel %vm1991, %v1933, %v2183
    %v2232 = vsel %vm1992, %v1736, %v2184
    %v2233 = vsel %vm1993, %v1738, %v2185
    %v2234 = vsel %vm1994, %v1938, %v2186
    %v2235 = vsel %vm1995, %v1740, %v2187
    %v2236 = vsel %vm1996, %v1742, %v2188
    %v2237 = vsel %vm1997, %v1941, %v2189
    %v2238 = vsel %vm1998, %v1746, %v2190
    %v2239 = vsel %vm1999, %v1748, %v2191
    %v2240 = vsel %vm2000, %v1946, %v2192
    %v2241 = vsel %vm2001, %v1750, %v2193
    %v2242 = vsel %vm2002, %v1752, %v2194
    %v2243 = vsel %vm2003, %v1949, %v2195
    %v2244 = vsel %vm2004, %v1756, %v2196
    %v2245 = vsel %vm2005, %v1758, %v2197
    %v2246 = vsel %vm2006, %v1954, %v2198
    %v2247 = vsel %vm2007, %v1760, %v2199
    %v2248 = vsel %vm2008, %v1762, %v2200
    %v2249 = vsel %vm2009, %v1957, %v2201
    %v2250 = vsel %vm2010, %v1766, %v2202
    %v2251 = vsel %vm2011, %v1768, %v2203
    %v2252 = vsel %vm2012, %v1962, %v2204
    %v2253 = vsel %vm2013, %v1770, %v2205
    %v2254 = vsel %vm2014, %v1772, %v2206
    %v2255 = vsel %vm2015, %v1965, %v2207
    %v2256 = vld [vmem:[%s5] sm:$0x7]
    %v2258 = vlaneseq
    %v2259 = vshrl.u32 %v2258, 7
    %v2260 = vsub.s32 0, %v2259
    %v2261 = vrot.slane %v2256, %v2260
    %v2262 = vlaneseq
    %v2263 = vshrl.u32 %v2262, 7
    %v2264 = vsub.s32 1, %v2263
    %v2265 = vrot.slane %v2256, %v2264
    %v2266 = vlaneseq
    %v2267 = vshrl.u32 %v2266, 7
    %v2268 = vsub.s32 2, %v2267
    %v2269 = vrot.slane %v2256, %v2268
    %v2273 = vmul.f32 %v2208, %v2261
    %v2274 = vmul.f32 %v2209, %v2265
    %v2275 = vmul.f32 %v2210, %v2269
    %v2276 = vmul.f32 %v2211, %v2261
    %v2277 = vmul.f32 %v2212, %v2265
    %v2278 = vmul.f32 %v2213, %v2269
    %v2279 = vmul.f32 %v2214, %v2261
    %v2280 = vmul.f32 %v2215, %v2265
    %v2281 = vmul.f32 %v2216, %v2269
    %v2282 = vmul.f32 %v2217, %v2261
    %v2283 = vmul.f32 %v2218, %v2265
    %v2284 = vmul.f32 %v2219, %v2269
    %v2285 = vmul.f32 %v2220, %v2261
    %v2286 = vmul.f32 %v2221, %v2265
    %v2287 = vmul.f32 %v2222, %v2269
    %v2288 = vmul.f32 %v2223, %v2261
    %v2289 = vmul.f32 %v2224, %v2265
    %v2290 = vmul.f32 %v2225, %v2269
    %v2291 = vmul.f32 %v2226, %v2261
    %v2292 = vmul.f32 %v2227, %v2265
    %v2293 = vmul.f32 %v2228, %v2269
    %v2294 = vmul.f32 %v2229, %v2261
    %v2295 = vmul.f32 %v2230, %v2265
    %v2296 = vmul.f32 %v2231, %v2269
    %v2297 = vmul.f32 %v2232, %v2261
    %v2298 = vmul.f32 %v2233, %v2265
    %v2299 = vmul.f32 %v2234, %v2269
    %v2300 = vmul.f32 %v2235, %v2261
    %v2301 = vmul.f32 %v2236, %v2265
    %v2302 = vmul.f32 %v2237, %v2269
    %v2303 = vmul.f32 %v2238, %v2261
    %v2304 = vmul.f32 %v2239, %v2265
    %v2305 = vmul.f32 %v2240, %v2269
    %v2306 = vmul.f32 %v2241, %v2261
    %v2307 = vmul.f32 %v2242, %v2265
    %v2308 = vmul.f32 %v2243, %v2269
    %v2309 = vmul.f32 %v2244, %v2261
    %v2310 = vmul.f32 %v2245, %v2265
    %v2311 = vmul.f32 %v2246, %v2269
    %v2312 = vmul.f32 %v2247, %v2261
    %v2313 = vmul.f32 %v2248, %v2265
    %v2314 = vmul.f32 %v2249, %v2269
    %v2315 = vmul.f32 %v2250, %v2261
    %v2316 = vmul.f32 %v2251, %v2265
    %v2317 = vmul.f32 %v2252, %v2269
    %v2318 = vmul.f32 %v2253, %v2261
    %v2319 = vmul.f32 %v2254, %v2265
    %v2320 = vmul.f32 %v2255, %v2269
    %v2321 = vadd.f32 %v2273, %v2274
    %v2322 = vsel %vm817, %v2275, 0.0
    %v2323 = vadd.f32 %v2321, %v2322
    %2324 = vadd.xlane.f32.xlu0 %v2323
    %v2325 = vpop.xlane.xlu0 %2324
    %v2326 = vadd.f32 %v2276, %v2277
    %v2327 = vsel %vm817, %v2278, 0.0
    %v2328 = vadd.f32 %v2326, %v2327
    %2329 = vadd.xlane.f32.xlu0 %v2328
    %v2330 = vpop.xlane.xlu0 %2329
    %v2331 = vadd.f32 %v2279, %v2280
    %v2332 = vsel %vm817, %v2281, 0.0
    %v2333 = vadd.f32 %v2331, %v2332
    %2334 = vadd.xlane.f32.xlu0 %v2333
    %v2335 = vpop.xlane.xlu0 %2334
    %v2336 = vadd.f32 %v2282, %v2283
    %v2337 = vsel %vm817, %v2284, 0.0
    %v2338 = vadd.f32 %v2336, %v2337
    %2339 = vadd.xlane.f32.xlu0 %v2338
    %v2340 = vpop.xlane.xlu0 %2339
    %v2341 = vadd.f32 %v2285, %v2286
    %v2342 = vsel %vm817, %v2287, 0.0
    %v2343 = vadd.f32 %v2341, %v2342
    %2344 = vadd.xlane.f32.xlu0 %v2343
    %v2345 = vpop.xlane.xlu0 %2344
    %v2346 = vadd.f32 %v2288, %v2289
    %v2347 = vsel %vm817, %v2290, 0.0
    %v2348 = vadd.f32 %v2346, %v2347
    %2349 = vadd.xlane.f32.xlu0 %v2348
    %v2350 = vpop.xlane.xlu0 %2349
    %v2351 = vadd.f32 %v2291, %v2292
    %v2352 = vsel %vm817, %v2293, 0.0
    %v2353 = vadd.f32 %v2351, %v2352
    %2354 = vadd.xlane.f32.xlu0 %v2353
    %v2355 = vpop.xlane.xlu0 %2354
    %v2356 = vadd.f32 %v2294, %v2295
    %v2357 = vsel %vm817, %v2296, 0.0
    %v2358 = vadd.f32 %v2356, %v2357
    %2359 = vadd.xlane.f32.xlu0 %v2358
    %v2360 = vpop.xlane.xlu0 %2359
    %v2361 = vadd.f32 %v2297, %v2298
    %v2362 = vsel %vm817, %v2299, 0.0
    %v2363 = vadd.f32 %v2361, %v2362
    %2364 = vadd.xlane.f32.xlu0 %v2363
    %v2365 = vpop.xlane.xlu0 %2364
    %v2366 = vadd.f32 %v2300, %v2301
    %v2367 = vsel %vm817, %v2302, 0.0
    %v2368 = vadd.f32 %v2366, %v2367
    %2369 = vadd.xlane.f32.xlu0 %v2368
    %v2370 = vpop.xlane.xlu0 %2369
    %v2371 = vadd.f32 %v2303, %v2304
    %v2372 = vsel %vm817, %v2305, 0.0
    %v2373 = vadd.f32 %v2371, %v2372
    %2374 = vadd.xlane.f32.xlu0 %v2373
    %v2375 = vpop.xlane.xlu0 %2374
    %v2376 = vadd.f32 %v2306, %v2307
    %v2377 = vsel %vm817, %v2308, 0.0
    %v2378 = vadd.f32 %v2376, %v2377
    %2379 = vadd.xlane.f32.xlu0 %v2378
    %v2380 = vpop.xlane.xlu0 %2379
    %v2381 = vadd.f32 %v2309, %v2310
    %v2382 = vsel %vm817, %v2311, 0.0
    %v2383 = vadd.f32 %v2381, %v2382
    %2384 = vadd.xlane.f32.xlu0 %v2383
    %v2385 = vpop.xlane.xlu0 %2384
    %v2386 = vadd.f32 %v2312, %v2313
    %v2387 = vsel %vm817, %v2314, 0.0
    %v2388 = vadd.f32 %v2386, %v2387
    %2389 = vadd.xlane.f32.xlu0 %v2388
    %v2390 = vpop.xlane.xlu0 %2389
    %v2391 = vadd.f32 %v2315, %v2316
    %v2392 = vsel %vm817, %v2317, 0.0
    %v2393 = vadd.f32 %v2391, %v2392
    %2394 = vadd.xlane.f32.xlu0 %v2393
    %v2395 = vpop.xlane.xlu0 %2394
    %v2396 = vadd.f32 %v2318, %v2319
    %v2397 = vsel %vm817, %v2320, 0.0
    %v2398 = vadd.f32 %v2396, %v2397
    %2399 = vadd.xlane.f32.xlu0 %v2398
    %v2400 = vpop.xlane.xlu0 %2399
    %v2401 = vld [vmem:[#allocation2] sm:$0x1]
    %v2403 = vlaneseq
    %v2404 = vshrl.u32 %v2403, 7
    %v2405 = vsub.s32 0, %v2404
    %v2406 = vrot.slane %v2401, %v2405
    %v2408 = vadd.f32 %v2325, %v2406
    %v2409 = vadd.f32 %v2330, %v2406
    %v2410 = vadd.f32 %v2335, %v2406
    %v2411 = vadd.f32 %v2340, %v2406
    %v2412 = vadd.f32 %v2345, %v2406
    %v2413 = vadd.f32 %v2350, %v2406
    %v2414 = vadd.f32 %v2355, %v2406
    %v2415 = vadd.f32 %v2360, %v2406
    %v2416 = vadd.f32 %v2365, %v2406
    %v2417 = vadd.f32 %v2370, %v2406
    %v2418 = vadd.f32 %v2375, %v2406
    %v2419 = vadd.f32 %v2380, %v2406
    %v2420 = vadd.f32 %v2385, %v2406
    %v2421 = vadd.f32 %v2390, %v2406
    %v2422 = vadd.f32 %v2395, %v2406
    %v2423 = vadd.f32 %v2400, %v2406
    %vm2424 = vcmask 7168
    %2425 = vst.msk [vmem:[%s7] sm:$0xff] %vm2424, %v2408
    %2426 = vst.msk [vmem:[%s7 + $0x8] sm:$0xff] %vm2424, %v2409
    %2427 = vst.msk [vmem:[%s7 + $0x10] sm:$0xff] %vm2424, %v2410
    %2428 = vst.msk [vmem:[%s7 + $0x18] sm:$0xff] %vm2424, %v2411
    %2429 = vst.msk [vmem:[%s7 + $0x20] sm:$0xff] %vm2424, %v2412
    %2430 = vst.msk [vmem:[%s7 + $0x28] sm:$0xff] %vm2424, %v2413
    %2431 = vst.msk [vmem:[%s7 + $0x30] sm:$0xff] %vm2424, %v2414
    %2432 = vst.msk [vmem:[%s7 + $0x38] sm:$0xff] %vm2424, %v2415
    %2433 = vst.msk [vmem:[%s7 + $0x40] sm:$0xff] %vm2424, %v2416
    %2434 = vst.msk [vmem:[%s7 + $0x48] sm:$0xff] %vm2424, %v2417
    %2435 = vst.msk [vmem:[%s7 + $0x50] sm:$0xff] %vm2424, %v2418
    %2436 = vst.msk [vmem:[%s7 + $0x58] sm:$0xff] %vm2424, %v2419
    %2437 = vst.msk [vmem:[%s7 + $0x60] sm:$0xff] %vm2424, %v2420
    %2438 = vst.msk [vmem:[%s7 + $0x68] sm:$0xff] %vm2424, %v2421
    %2439 = vst.msk [vmem:[%s7 + $0x70] sm:$0xff] %vm2424, %v2422
    %2440 = vst.msk [vmem:[%s7 + $0x78] sm:$0xff] %vm2424, %v2423
    // Predicated region
    $region34: #{tpu_custom_call.1} parent=1 // pred_check
      _
    $region35: #{tpu_custom_call.1} parent=1 // pred_check_branch
      %2442 = sbr.rel (0) target = $region37
    $region36: #{tpu_custom_call.1} parent=1 // pred_region
      _
    $region37: #{tpu_custom_call.1} parent=1 // pred_fallthru
      _
    // Predicated region
    $region38: #{tpu_custom_call.1} parent=1 // pred_check
      _
    $region39: #{tpu_custom_call.1} parent=1 // pred_check_branch
      %2444 = sbr.rel (0) target = $region41
    $region40: #{tpu_custom_call.1} parent=1 // pred_region
      _
    $region41: #{tpu_custom_call.1} parent=1 // pred_fallthru
      _
    %2445 = vsyncpa [#allocation4], 1

</llo_original>
